<compile_context>
chip_gen: v6e
topology: v6e:2x2x1
jax: 0.10.0
libtpu: 0.0.40
codegen_flags: <defaults>
</compile_context>

<pallas_src>
import jax
import jax.numpy as jnp
from jax import lax
from jax.experimental import pallas as pl
from jax.experimental.pallas import tpu as pltpu


def _round_up(x: int, m: int) -> int:
    return (x + m - 1) // m * m


def mf_kernel(uid_ref, mid_ref,         # scalar prefetch (SMEM, int32)
              utab_hbm, mtab_hbm,       # embedding tables (HBM, pl.ANY)
              out_ref,                  # (TU, TM) VMEM output tile
              u_buf, m_buf,             # VMEM row-gather scratch
              u_sem, m_sem):            # DMA semaphores
    i = pl.program_id(0)                # user-tile index   ("parallel")
    j = pl.program_id(1)                # movie-tile index  ("arbitrary")
    tu = u_buf.shape[0]
    tm = m_buf.shape[0]

    # --- Gather the TU user rows for this tile.  u_buf is scratch (persists
    # across the inner movie loop), so only refresh it when j wraps to 0.
    @pl.when(j == 0)
    def _():
        for r in range(tu):
            pltpu.make_async_copy(
                utab_hbm.at[uid_ref[i * tu + r]], u_buf.at[r], u_sem.at[0]
            ).start()
        for r in range(tu):
            # Same-shaped descriptor; each wait consumes one row's byte count.
            pltpu.make_async_copy(
                utab_hbm.at[0], u_buf.at[r], u_sem.at[0]).wait()

    # --- Gather the TM movie rows for this tile (changes every grid step).
    for r in range(tm):
        pltpu.make_async_copy(
            mtab_hbm.at[mid_ref[j * tm + r]], m_buf.at[r], m_sem.at[0]
        ).start()
    for r in range(tm):
        pltpu.make_async_copy(mtab_hbm.at[0], m_buf.at[r], m_sem.at[0]).wait()

    # --- user_emb @ movie_emb.T without materializing a transpose: contract
    # the embedding (last) dim of both operands directly on the MXU.
    out_ref[...] = lax.dot_general(
        u_buf[...], m_buf[...],
        dimension_numbers=(((1,), (1,)), ((), ())),
        preferred_element_type=jnp.float32,
    ).astype(out_ref.dtype)


def matrix_factorization_forward(user_ids, movie_ids, user_table, movie_table,
                                 *, tile_u=None, tile_m=None):
    """Pallas forward pass matching MatrixFactorization.forward."""
    bu = int(user_ids.shape[0])
    bm = int(movie_ids.shape[0])
    num_users, d = user_table.shape
    num_movies, d2 = movie_table.shape
    assert d == d2, "embedding dims must match"

    # Tile sizes: lane-dense (multiple-of-128) output tiles once the batch is
    # big enough; otherwise a single tile covering the 8-rounded batch so the
    # output block equals the (padded) full array.
    if tile_u is None:
        tile_u = 256 if bu >= 256 else _round_up(bu, 8)
    if tile_m is None:
        tile_m = 256 if bm >= 256 else _round_up(bm, 8)

    bu_pad = _round_up(bu, tile_u)
    bm_pad = _round_up(bm, tile_m)

    # Clamp ids (OOB protection) and pad to the tiled extent with a valid row.
    uid = jnp.clip(user_ids.astype(jnp.int32), 0, num_users - 1)
    mid = jnp.clip(movie_ids.astype(jnp.int32), 0, num_movies - 1)
    uid = jnp.pad(uid, (0, bu_pad - bu))
    mid = jnp.pad(mid, (0, bm_pad - bm))

    dsize = user_table.dtype.itemsize
    # Working set: gathered row tiles + double-buffered output tile.
    working = (tile_u + tile_m) * d * dsize + 2 * tile_u * tile_m * 4
    vmem_limit = int(min(64 * 1024 * 1024,
                         max(4 * 1024 * 1024, 2 * working + (1 << 21))))

    grid = (bu_pad // tile_u, bm_pad // tile_m)

    out = pl.pallas_call(
        mf_kernel,
        out_shape=jax.ShapeDtypeStruct((bu_pad, bm_pad), jnp.float32),
        grid_spec=pltpu.PrefetchScalarGridSpec(
            num_scalar_prefetch=2,
            grid=grid,
            in_specs=[
                pl.BlockSpec(memory_space=pl.ANY),   # user table stays in HBM
                pl.BlockSpec(memory_space=pl.ANY),   # movie table stays in HBM
            ],
            out_specs=pl.BlockSpec((tile_u, tile_m),
                                   lambda i, j, uid, mid: (i, j)),
            scratch_shapes=[
                pltpu.VMEM((tile_u, d), user_table.dtype),
                pltpu.VMEM((tile_m, d), movie_table.dtype),
                pltpu.SemaphoreType.DMA((1,)),
                pltpu.SemaphoreType.DMA((1,)),
            ],
        ),
        compiler_params=pltpu.CompilerParams(
            # User-tile axis shards across TensorCores (v7x megacore); the
            # movie-tile axis must stay sequential because the user-row gather
            # is cached across it (refreshed only at j == 0).
            dimension_semantics=("parallel", "arbitrary"),
            vmem_limit_bytes=vmem_limit,
        ),
        cost_estimate=pl.CostEstimate(
            flops=2 * bu_pad * bm_pad * d,
            transcendentals=0,
            bytes_accessed=(bu_pad + bm_pad) * d * dsize + bu_pad * bm_pad * 4,
        ),
    )(uid, mid, user_table, movie_table)

    return out[:bu, :bm]


if __name__ == "__main__":
    # Small deterministic setup.
    # TODO(synk): num_users comes from a sqlite3 query in the original module;
    # replaced by a constant here.
    num_users = 32
    num_movies = 101          # matches the module's constant
    embedding_dim = 32
    batch = 8

    key = jax.random.PRNGKey(0)
    k_u, k_m, k_ui, k_mi = jax.random.split(key, 4)

    # nn.Embedding default init: weights ~ N(0, 1), float32.
    user_table = jax.random.normal(k_u, (num_users, embedding_dim), jnp.float32)
    movie_table = jax.random.normal(k_m, (num_movies, embedding_dim), jnp.float32)

    user_ids = jax.random.randint(k_ui, (batch,), 0, num_users, jnp.int32)
    movie_ids = jax.random.randint(k_mi, (batch,), 0, num_movies, jnp.int32)

    out = matrix_factorization_forward(user_ids, movie_ids,
                                       user_table, movie_table)
    out = jax.block_until_ready(out)

    # Pure-JAX reference (embedding gather + matmul) at highest precision.
    ref = jnp.dot(user_table[user_ids], movie_table[movie_ids].T,
                  precision=lax.Precision.HIGHEST)
    assert out.shape == (batch, batch)
    assert jnp.allclose(out, ref, atol=1e-2, rtol=1e-2), "mismatch vs reference"

    print("KERNEL_OK")
</pallas_src>

<mosaic_0001>
module attributes {stable_mosaic.version = 11 : i64} {
  func.func @mf_kernel(%arg0: i32, %arg1: i32, %arg2: memref<8xi32, #tpu.memory_space<smem>>, %arg3: memref<8xi32, #tpu.memory_space<smem>>, %arg4: memref<32x32xf32, #tpu.memory_space<any>>, %arg5: memref<101x32xf32, #tpu.memory_space<any>>, %arg6: memref<8x8xf32, #tpu.memory_space<vmem>>, %arg7: memref<8x32xf32, #tpu.memory_space<vmem>>, %arg8: memref<8x32xf32, #tpu.memory_space<vmem>>, %arg9: memref<1x!tpu.dma_semaphore, #tpu.memory_space<semaphore_mem>>, %arg10: memref<1x!tpu.dma_semaphore, #tpu.memory_space<semaphore_mem>>) attributes {dimension_semantics = [#tpu.dimension_semantics<parallel>, #tpu.dimension_semantics<arbitrary>], iteration_bounds = array<i64: 1, 1>, scalar_prefetch = 2 : i64, scratch_operands = 4 : i64, tpu.core_type = #tpu.core_type<tc>, window_params = [{}, {}, {transform_indices = @transform_2, window_bounds = array<i64: 8, 8>}]} {
    %c0_i32 = arith.constant 0 : i32
    %0 = arith.cmpi eq, %arg1, %c0_i32 : i32
    %1 = arith.extui %0 : i1 to i32
    %c0_i32_0 = arith.constant 0 : i32
    %2 = arith.cmpi ne, %1, %c0_i32_0 : i32
    scf.if %2 {
      %c8_i32_86 = arith.constant 8 : i32
      %135 = arith.muli %arg0, %c8_i32_86 : i32
      %c0_i32_87 = arith.constant 0 : i32
      %136 = arith.addi %135, %c0_i32_87 : i32
      %137 = arith.index_cast %136 : i32 to index
      %138 = memref.load %arg2[%137] : memref<8xi32, #tpu.memory_space<smem>>
      %c0_i32_88 = arith.constant 0 : i32
      %c0_i32_89 = arith.constant 0 : i32
      %c0_i32_90 = arith.constant 0 : i32
      %139 = tpu.memref_slice %arg4[%138, %c0_i32_90] : memref<32x32xf32, #tpu.memory_space<any>> -> memref<1x32xf32, #tpu.memory_space<any>>
      %140 = tpu.memref_squeeze %139 : memref<1x32xf32, #tpu.memory_space<any>> -> memref<32xf32, #tpu.memory_space<any>>
      %c0_i32_91 = arith.constant 0 : i32
      %141 = tpu.memref_slice %arg7[%c0_i32_88, %c0_i32_91] : memref<8x32xf32, #tpu.memory_space<vmem>> -> memref<1x32xf32, #tpu.memory_space<vmem>>
      %142 = tpu.memref_squeeze %141 : memref<1x32xf32, #tpu.memory_space<vmem>> -> memref<32xf32, #tpu.memory_space<vmem>>
      %143 = tpu.memref_slice %arg9[%c0_i32_89] : memref<1x!tpu.dma_semaphore, #tpu.memory_space<semaphore_mem>> -> memref<1x!tpu.dma_semaphore, #tpu.memory_space<semaphore_mem>>
      %144 = tpu.memref_squeeze %143 : memref<1x!tpu.dma_semaphore, #tpu.memory_space<semaphore_mem>> -> memref<!tpu.dma_semaphore, #tpu.memory_space<semaphore_mem>>
      tpu.enqueue_dma source(%140 : memref<32xf32, #tpu.memory_space<any>>) target(%142 : memref<32xf32, #tpu.memory_space<vmem>>) target_semaphore(%144 : memref<!tpu.dma_semaphore, #tpu.memory_space<semaphore_mem>>)
      %c8_i32_92 = arith.constant 8 : i32
      %145 = arith.muli %arg0, %c8_i32_92 : i32
      %c1_i32_93 = arith.constant 1 : i32
      %146 = arith.addi %145, %c1_i32_93 : i32
      %147 = arith.index_cast %146 : i32 to index
      %148 = memref.load %arg2[%147] : memref<8xi32, #tpu.memory_space<smem>>
      %c1_i32_94 = arith.constant 1 : i32
      %c0_i32_95 = arith.constant 0 : i32
      %c0_i32_96 = arith.constant 0 : i32
      %149 = tpu.memref_slice %arg4[%148, %c0_i32_96] : memref<32x32xf32, #tpu.memory_space<any>> -> memref<1x32xf32, #tpu.memory_space<any>>
      %150 = tpu.memref_squeeze %149 : memref<1x32xf32, #tpu.memory_space<any>> -> memref<32xf32, #tpu.memory_space<any>>
      %c0_i32_97 = arith.constant 0 : i32
      %151 = tpu.memref_slice %arg7[%c1_i32_94, %c0_i32_97] : memref<8x32xf32, #tpu.memory_space<vmem>> -> memref<1x32xf32, #tpu.memory_space<vmem>>
      %152 = tpu.memref_squeeze %151 : memref<1x32xf32, #tpu.memory_space<vmem>> -> memref<32xf32, #tpu.memory_space<vmem>>
      %153 = tpu.memref_slice %arg9[%c0_i32_95] : memref<1x!tpu.dma_semaphore, #tpu.memory_space<semaphore_mem>> -> memref<1x!tpu.dma_semaphore, #tpu.memory_space<semaphore_mem>>
      %154 = tpu.memref_squeeze %153 : memref<1x!tpu.dma_semaphore, #tpu.memory_space<semaphore_mem>> -> memref<!tpu.dma_semaphore, #tpu.memory_space<semaphore_mem>>
      tpu.enqueue_dma source(%150 : memref<32xf32, #tpu.memory_space<any>>) target(%152 : memref<32xf32, #tpu.memory_space<vmem>>) target_semaphore(%154 : memref<!tpu.dma_semaphore, #tpu.memory_space<semaphore_mem>>)
      %c8_i32_98 = arith.constant 8 : i32
      %155 = arith.muli %arg0, %c8_i32_98 : i32
      %c2_i32_99 = arith.constant 2 : i32
      %156 = arith.addi %155, %c2_i32_99 : i32
      %157 = arith.index_cast %156 : i32 to index
      %158 = memref.load %arg2[%157] : memref<8xi32, #tpu.memory_space<smem>>
      %c2_i32_100 = arith.constant 2 : i32
      %c0_i32_101 = arith.constant 0 : i32
      %c0_i32_102 = arith.constant 0 : i32
      %159 = tpu.memref_slice %arg4[%158, %c0_i32_102] : memref<32x32xf32, #tpu.memory_space<any>> -> memref<1x32xf32, #tpu.memory_space<any>>
      %160 = tpu.memref_squeeze %159 : memref<1x32xf32, #tpu.memory_space<any>> -> memref<32xf32, #tpu.memory_space<any>>
      %c0_i32_103 = arith.constant 0 : i32
      %161 = tpu.memref_slice %arg7[%c2_i32_100, %c0_i32_103] : memref<8x32xf32, #tpu.memory_space<vmem>> -> memref<1x32xf32, #tpu.memory_space<vmem>>
      %162 = tpu.memref_squeeze %161 : memref<1x32xf32, #tpu.memory_space<vmem>> -> memref<32xf32, #tpu.memory_space<vmem>>
      %163 = tpu.memref_slice %arg9[%c0_i32_101] : memref<1x!tpu.dma_semaphore, #tpu.memory_space<semaphore_mem>> -> memref<1x!tpu.dma_semaphore, #tpu.memory_space<semaphore_mem>>
      %164 = tpu.memref_squeeze %163 : memref<1x!tpu.dma_semaphore, #tpu.memory_space<semaphore_mem>> -> memref<!tpu.dma_semaphore, #tpu.memory_space<semaphore_mem>>
      tpu.enqueue_dma source(%160 : memref<32xf32, #tpu.memory_space<any>>) target(%162 : memref<32xf32, #tpu.memory_space<vmem>>) target_semaphore(%164 : memref<!tpu.dma_semaphore, #tpu.memory_space<semaphore_mem>>)
      %c8_i32_104 = arith.constant 8 : i32
      %165 = arith.muli %arg0, %c8_i32_104 : i32
      %c3_i32_105 = arith.constant 3 : i32
      %166 = arith.addi %165, %c3_i32_105 : i32
      %167 = arith.index_cast %166 : i32 to index
      %168 = memref.load %arg2[%167] : memref<8xi32, #tpu.memory_space<smem>>
      %c3_i32_106 = arith.constant 3 : i32
      %c0_i32_107 = arith.constant 0 : i32
      %c0_i32_108 = arith.constant 0 : i32
      %169 = tpu.memref_slice %arg4[%168, %c0_i32_108] : memref<32x32xf32, #tpu.memory_space<any>> -> memref<1x32xf32, #tpu.memory_space<any>>
      %170 = tpu.memref_squeeze %169 : memref<1x32xf32, #tpu.memory_space<any>> -> memref<32xf32, #tpu.memory_space<any>>
      %c0_i32_109 = arith.constant 0 : i32
      %171 = tpu.memref_slice %arg7[%c3_i32_106, %c0_i32_109] : memref<8x32xf32, #tpu.memory_space<vmem>> -> memref<1x32xf32, #tpu.memory_space<vmem>>
      %172 = tpu.memref_squeeze %171 : memref<1x32xf32, #tpu.memory_space<vmem>> -> memref<32xf32, #tpu.memory_space<vmem>>
      %173 = tpu.memref_slice %arg9[%c0_i32_107] : memref<1x!tpu.dma_semaphore, #tpu.memory_space<semaphore_mem>> -> memref<1x!tpu.dma_semaphore, #tpu.memory_space<semaphore_mem>>
      %174 = tpu.memref_squeeze %173 : memref<1x!tpu.dma_semaphore, #tpu.memory_space<semaphore_mem>> -> memref<!tpu.dma_semaphore, #tpu.memory_space<semaphore_mem>>
      tpu.enqueue_dma source(%170 : memref<32xf32, #tpu.memory_space<any>>) target(%172 : memref<32xf32, #tpu.memory_space<vmem>>) target_semaphore(%174 : memref<!tpu.dma_semaphore, #tpu.memory_space<semaphore_mem>>)
      %c8_i32_110 = arith.constant 8 : i32
      %175 = arith.muli %arg0, %c8_i32_110 : i32
      %c4_i32_111 = arith.constant 4 : i32
      %176 = arith.addi %175, %c4_i32_111 : i32
      %177 = arith.index_cast %176 : i32 to index
      %178 = memref.load %arg2[%177] : memref<8xi32, #tpu.memory_space<smem>>
      %c4_i32_112 = arith.constant 4 : i32
      %c0_i32_113 = arith.constant 0 : i32
      %c0_i32_114 = arith.constant 0 : i32
      %179 = tpu.memref_slice %arg4[%178, %c0_i32_114] : memref<32x32xf32, #tpu.memory_space<any>> -> memref<1x32xf32, #tpu.memory_space<any>>
      %180 = tpu.memref_squeeze %179 : memref<1x32xf32, #tpu.memory_space<any>> -> memref<32xf32, #tpu.memory_space<any>>
      %c0_i32_115 = arith.constant 0 : i32
      %181 = tpu.memref_slice %arg7[%c4_i32_112, %c0_i32_115] : memref<8x32xf32, #tpu.memory_space<vmem>> -> memref<1x32xf32, #tpu.memory_space<vmem>>
      %182 = tpu.memref_squeeze %181 : memref<1x32xf32, #tpu.memory_space<vmem>> -> memref<32xf32, #tpu.memory_space<vmem>>
      %183 = tpu.memref_slice %arg9[%c0_i32_113] : memref<1x!tpu.dma_semaphore, #tpu.memory_space<semaphore_mem>> -> memref<1x!tpu.dma_semaphore, #tpu.memory_space<semaphore_mem>>
      %184 = tpu.memref_squeeze %183 : memref<1x!tpu.dma_semaphore, #tpu.memory_space<semaphore_mem>> -> memref<!tpu.dma_semaphore, #tpu.memory_space<semaphore_mem>>
      tpu.enqueue_dma source(%180 : memref<32xf32, #tpu.memory_space<any>>) target(%182 : memref<32xf32, #tpu.memory_space<vmem>>) target_semaphore(%184 : memref<!tpu.dma_semaphore, #tpu.memory_space<semaphore_mem>>)
      %c8_i32_116 = arith.constant 8 : i32
      %185 = arith.muli %arg0, %c8_i32_116 : i32
      %c5_i32_117 = arith.constant 5 : i32
      %186 = arith.addi %185, %c5_i32_117 : i32
      %187 = arith.index_cast %186 : i32 to index
      %188 = memref.load %arg2[%187] : memref<8xi32, #tpu.memory_space<smem>>
      %c5_i32_118 = arith.constant 5 : i32
      %c0_i32_119 = arith.constant 0 : i32
      %c0_i32_120 = arith.constant 0 : i32
      %189 = tpu.memref_slice %arg4[%188, %c0_i32_120] : memref<32x32xf32, #tpu.memory_space<any>> -> memref<1x32xf32, #tpu.memory_space<any>>
      %190 = tpu.memref_squeeze %189 : memref<1x32xf32, #tpu.memory_space<any>> -> memref<32xf32, #tpu.memory_space<any>>
      %c0_i32_121 = arith.constant 0 : i32
      %191 = tpu.memref_slice %arg7[%c5_i32_118, %c0_i32_121] : memref<8x32xf32, #tpu.memory_space<vmem>> -> memref<1x32xf32, #tpu.memory_space<vmem>>
      %192 = tpu.memref_squeeze %191 : memref<1x32xf32, #tpu.memory_space<vmem>> -> memref<32xf32, #tpu.memory_space<vmem>>
      %193 = tpu.memref_slice %arg9[%c0_i32_119] : memref<1x!tpu.dma_semaphore, #tpu.memory_space<semaphore_mem>> -> memref<1x!tpu.dma_semaphore, #tpu.memory_space<semaphore_mem>>
      %194 = tpu.memref_squeeze %193 : memref<1x!tpu.dma_semaphore, #tpu.memory_space<semaphore_mem>> -> memref<!tpu.dma_semaphore, #tpu.memory_space<semaphore_mem>>
      tpu.enqueue_dma source(%190 : memref<32xf32, #tpu.memory_space<any>>) target(%192 : memref<32xf32, #tpu.memory_space<vmem>>) target_semaphore(%194 : memref<!tpu.dma_semaphore, #tpu.memory_space<semaphore_mem>>)
      %c8_i32_122 = arith.constant 8 : i32
      %195 = arith.muli %arg0, %c8_i32_122 : i32
      %c6_i32_123 = arith.constant 6 : i32
      %196 = arith.addi %195, %c6_i32_123 : i32
      %197 = arith.index_cast %196 : i32 to index
      %198 = memref.load %arg2[%197] : memref<8xi32, #tpu.memory_space<smem>>
      %c6_i32_124 = arith.constant 6 : i32
      %c0_i32_125 = arith.constant 0 : i32
      %c0_i32_126 = arith.constant 0 : i32
      %199 = tpu.memref_slice %arg4[%198, %c0_i32_126] : memref<32x32xf32, #tpu.memory_space<any>> -> memref<1x32xf32, #tpu.memory_space<any>>
      %200 = tpu.memref_squeeze %199 : memref<1x32xf32, #tpu.memory_space<any>> -> memref<32xf32, #tpu.memory_space<any>>
      %c0_i32_127 = arith.constant 0 : i32
      %201 = tpu.memref_slice %arg7[%c6_i32_124, %c0_i32_127] : memref<8x32xf32, #tpu.memory_space<vmem>> -> memref<1x32xf32, #tpu.memory_space<vmem>>
      %202 = tpu.memref_squeeze %201 : memref<1x32xf32, #tpu.memory_space<vmem>> -> memref<32xf32, #tpu.memory_space<vmem>>
      %203 = tpu.memref_slice %arg9[%c0_i32_125] : memref<1x!tpu.dma_semaphore, #tpu.memory_space<semaphore_mem>> -> memref<1x!tpu.dma_semaphore, #tpu.memory_space<semaphore_mem>>
      %204 = tpu.memref_squeeze %203 : memref<1x!tpu.dma_semaphore, #tpu.memory_space<semaphore_mem>> -> memref<!tpu.dma_semaphore, #tpu.memory_space<semaphore_mem>>
      tpu.enqueue_dma source(%200 : memref<32xf32, #tpu.memory_space<any>>) target(%202 : memref<32xf32, #tpu.memory_space<vmem>>) target_semaphore(%204 : memref<!tpu.dma_semaphore, #tpu.memory_space<semaphore_mem>>)
      %c8_i32_128 = arith.constant 8 : i32
      %205 = arith.muli %arg0, %c8_i32_128 : i32
      %c7_i32_129 = arith.constant 7 : i32
      %206 = arith.addi %205, %c7_i32_129 : i32
      %207 = arith.index_cast %206 : i32 to index
      %208 = memref.load %arg2[%207] : memref<8xi32, #tpu.memory_space<smem>>
      %c7_i32_130 = arith.constant 7 : i32
      %c0_i32_131 = arith.constant 0 : i32
      %c0_i32_132 = arith.constant 0 : i32
      %209 = tpu.memref_slice %arg4[%208, %c0_i32_132] : memref<32x32xf32, #tpu.memory_space<any>> -> memref<1x32xf32, #tpu.memory_space<any>>
      %210 = tpu.memref_squeeze %209 : memref<1x32xf32, #tpu.memory_space<any>> -> memref<32xf32, #tpu.memory_space<any>>
      %c0_i32_133 = arith.constant 0 : i32
      %211 = tpu.memref_slice %arg7[%c7_i32_130, %c0_i32_133] : memref<8x32xf32, #tpu.memory_space<vmem>> -> memref<1x32xf32, #tpu.memory_space<vmem>>
      %212 = tpu.memref_squeeze %211 : memref<1x32xf32, #tpu.memory_space<vmem>> -> memref<32xf32, #tpu.memory_space<vmem>>
      %213 = tpu.memref_slice %arg9[%c0_i32_131] : memref<1x!tpu.dma_semaphore, #tpu.memory_space<semaphore_mem>> -> memref<1x!tpu.dma_semaphore, #tpu.memory_space<semaphore_mem>>
      %214 = tpu.memref_squeeze %213 : memref<1x!tpu.dma_semaphore, #tpu.memory_space<semaphore_mem>> -> memref<!tpu.dma_semaphore, #tpu.memory_space<semaphore_mem>>
      tpu.enqueue_dma source(%210 : memref<32xf32, #tpu.memory_space<any>>) target(%212 : memref<32xf32, #tpu.memory_space<vmem>>) target_semaphore(%214 : memref<!tpu.dma_semaphore, #tpu.memory_space<semaphore_mem>>)
      %c0_i32_134 = arith.constant 0 : i32
      %c0_i32_135 = arith.constant 0 : i32
      %c0_i32_136 = arith.constant 0 : i32
      %c0_i32_137 = arith.constant 0 : i32
      %215 = tpu.memref_slice %arg4[%c0_i32_134, %c0_i32_137] : memref<32x32xf32, #tpu.memory_space<any>> -> memref<1x32xf32, #tpu.memory_space<any>>
      %216 = tpu.memref_squeeze %215 : memref<1x32xf32, #tpu.memory_space<any>> -> memref<32xf32, #tpu.memory_space<any>>
      %c0_i32_138 = arith.constant 0 : i32
      %217 = tpu.memref_slice %arg7[%c0_i32_135, %c0_i32_138] : memref<8x32xf32, #tpu.memory_space<vmem>> -> memref<1x32xf32, #tpu.memory_space<vmem>>
      %218 = tpu.memref_squeeze %217 : memref<1x32xf32, #tpu.memory_space<vmem>> -> memref<32xf32, #tpu.memory_space<vmem>>
      %219 = tpu.memref_slice %arg9[%c0_i32_136] : memref<1x!tpu.dma_semaphore, #tpu.memory_space<semaphore_mem>> -> memref<1x!tpu.dma_semaphore, #tpu.memory_space<semaphore_mem>>
      %220 = tpu.memref_squeeze %219 : memref<1x!tpu.dma_semaphore, #tpu.memory_space<semaphore_mem>> -> memref<!tpu.dma_semaphore, #tpu.memory_space<semaphore_mem>>
      tpu.wait_dma2 semaphore(%220 : memref<!tpu.dma_semaphore, #tpu.memory_space<semaphore_mem>>) src(%216 : memref<32xf32, #tpu.memory_space<any>>) dst(%218 : memref<32xf32, #tpu.memory_space<vmem>>)
      %c0_i32_139 = arith.constant 0 : i32
      %c1_i32_140 = arith.constant 1 : i32
      %c0_i32_141 = arith.constant 0 : i32
      %c0_i32_142 = arith.constant 0 : i32
      %221 = tpu.memref_slice %arg4[%c0_i32_139, %c0_i32_142] : memref<32x32xf32, #tpu.memory_space<any>> -> memref<1x32xf32, #tpu.memory_space<any>>
      %222 = tpu.memref_squeeze %221 : memref<1x32xf32, #tpu.memory_space<any>> -> memref<32xf32, #tpu.memory_space<any>>
      %c0_i32_143 = arith.constant 0 : i32
      %223 = tpu.memref_slice %arg7[%c1_i32_140, %c0_i32_143] : memref<8x32xf32, #tpu.memory_space<vmem>> -> memref<1x32xf32, #tpu.memory_space<vmem>>
      %224 = tpu.memref_squeeze %223 : memref<1x32xf32, #tpu.memory_space<vmem>> -> memref<32xf32, #tpu.memory_space<vmem>>
      %225 = tpu.memref_slice %arg9[%c0_i32_141] : memref<1x!tpu.dma_semaphore, #tpu.memory_space<semaphore_mem>> -> memref<1x!tpu.dma_semaphore, #tpu.memory_space<semaphore_mem>>
      %226 = tpu.memref_squeeze %225 : memref<1x!tpu.dma_semaphore, #tpu.memory_space<semaphore_mem>> -> memref<!tpu.dma_semaphore, #tpu.memory_space<semaphore_mem>>
      tpu.wait_dma2 semaphore(%226 : memref<!tpu.dma_semaphore, #tpu.memory_space<semaphore_mem>>) src(%222 : memref<32xf32, #tpu.memory_space<any>>) dst(%224 : memref<32xf32, #tpu.memory_space<vmem>>)
      %c0_i32_144 = arith.constant 0 : i32
      %c2_i32_145 = arith.constant 2 : i32
      %c0_i32_146 = arith.constant 0 : i32
      %c0_i32_147 = arith.constant 0 : i32
      %227 = tpu.memref_slice %arg4[%c0_i32_144, %c0_i32_147] : memref<32x32xf32, #tpu.memory_space<any>> -> memref<1x32xf32, #tpu.memory_space<any>>
      %228 = tpu.memref_squeeze %227 : memref<1x32xf32, #tpu.memory_space<any>> -> memref<32xf32, #tpu.memory_space<any>>
      %c0_i32_148 = arith.constant 0 : i32
      %229 = tpu.memref_slice %arg7[%c2_i32_145, %c0_i32_148] : memref<8x32xf32, #tpu.memory_space<vmem>> -> memref<1x32xf32, #tpu.memory_space<vmem>>
      %230 = tpu.memref_squeeze %229 : memref<1x32xf32, #tpu.memory_space<vmem>> -> memref<32xf32, #tpu.memory_space<vmem>>
      %231 = tpu.memref_slice %arg9[%c0_i32_146] : memref<1x!tpu.dma_semaphore, #tpu.memory_space<semaphore_mem>> -> memref<1x!tpu.dma_semaphore, #tpu.memory_space<semaphore_mem>>
      %232 = tpu.memref_squeeze %231 : memref<1x!tpu.dma_semaphore, #tpu.memory_space<semaphore_mem>> -> memref<!tpu.dma_semaphore, #tpu.memory_space<semaphore_mem>>
      tpu.wait_dma2 semaphore(%232 : memref<!tpu.dma_semaphore, #tpu.memory_space<semaphore_mem>>) src(%228 : memref<32xf32, #tpu.memory_space<any>>) dst(%230 : memref<32xf32, #tpu.memory_space<vmem>>)
      %c0_i32_149 = arith.constant 0 : i32
      %c3_i32_150 = arith.constant 3 : i32
      %c0_i32_151 = arith.constant 0 : i32
      %c0_i32_152 = arith.constant 0 : i32
      %233 = tpu.memref_slice %arg4[%c0_i32_149, %c0_i32_152] : memref<32x32xf32, #tpu.memory_space<any>> -> memref<1x32xf32, #tpu.memory_space<any>>
      %234 = tpu.memref_squeeze %233 : memref<1x32xf32, #tpu.memory_space<any>> -> memref<32xf32, #tpu.memory_space<any>>
      %c0_i32_153 = arith.constant 0 : i32
      %235 = tpu.memref_slice %arg7[%c3_i32_150, %c0_i32_153] : memref<8x32xf32, #tpu.memory_space<vmem>> -> memref<1x32xf32, #tpu.memory_space<vmem>>
      %236 = tpu.memref_squeeze %235 : memref<1x32xf32, #tpu.memory_space<vmem>> -> memref<32xf32, #tpu.memory_space<vmem>>
      %237 = tpu.memref_slice %arg9[%c0_i32_151] : memref<1x!tpu.dma_semaphore, #tpu.memory_space<semaphore_mem>> -> memref<1x!tpu.dma_semaphore, #tpu.memory_space<semaphore_mem>>
      %238 = tpu.memref_squeeze %237 : memref<1x!tpu.dma_semaphore, #tpu.memory_space<semaphore_mem>> -> memref<!tpu.dma_semaphore, #tpu.memory_space<semaphore_mem>>
      tpu.wait_dma2 semaphore(%238 : memref<!tpu.dma_semaphore, #tpu.memory_space<semaphore_mem>>) src(%234 : memref<32xf32, #tpu.memory_space<any>>) dst(%236 : memref<32xf32, #tpu.memory_space<vmem>>)
      %c0_i32_154 = arith.constant 0 : i32
      %c4_i32_155 = arith.constant 4 : i32
      %c0_i32_156 = arith.constant 0 : i32
      %c0_i32_157 = arith.constant 0 : i32
      %239 = tpu.memref_slice %arg4[%c0_i32_154, %c0_i32_157] : memref<32x32xf32, #tpu.memory_space<any>> -> memref<1x32xf32, #tpu.memory_space<any>>
      %240 = tpu.memref_squeeze %239 : memref<1x32xf32, #tpu.memory_space<any>> -> memref<32xf32, #tpu.memory_space<any>>
      %c0_i32_158 = arith.constant 0 : i32
      %241 = tpu.memref_slice %arg7[%c4_i32_155, %c0_i32_158] : memref<8x32xf32, #tpu.memory_space<vmem>> -> memref<1x32xf32, #tpu.memory_space<vmem>>
      %242 = tpu.memref_squeeze %241 : memref<1x32xf32, #tpu.memory_space<vmem>> -> memref<32xf32, #tpu.memory_space<vmem>>
      %243 = tpu.memref_slice %arg9[%c0_i32_156] : memref<1x!tpu.dma_semaphore, #tpu.memory_space<semaphore_mem>> -> memref<1x!tpu.dma_semaphore, #tpu.memory_space<semaphore_mem>>
      %244 = tpu.memref_squeeze %243 : memref<1x!tpu.dma_semaphore, #tpu.memory_space<semaphore_mem>> -> memref<!tpu.dma_semaphore, #tpu.memory_space<semaphore_mem>>
      tpu.wait_dma2 semaphore(%244 : memref<!tpu.dma_semaphore, #tpu.memory_space<semaphore_mem>>) src(%240 : memref<32xf32, #tpu.memory_space<any>>) dst(%242 : memref<32xf32, #tpu.memory_space<vmem>>)
      %c0_i32_159 = arith.constant 0 : i32
      %c5_i32_160 = arith.constant 5 : i32
      %c0_i32_161 = arith.constant 0 : i32
      %c0_i32_162 = arith.constant 0 : i32
      %245 = tpu.memref_slice %arg4[%c0_i32_159, %c0_i32_162] : memref<32x32xf32, #tpu.memory_space<any>> -> memref<1x32xf32, #tpu.memory_space<any>>
      %246 = tpu.memref_squeeze %245 : memref<1x32xf32, #tpu.memory_space<any>> -> memref<32xf32, #tpu.memory_space<any>>
      %c0_i32_163 = arith.constant 0 : i32
      %247 = tpu.memref_slice %arg7[%c5_i32_160, %c0_i32_163] : memref<8x32xf32, #tpu.memory_space<vmem>> -> memref<1x32xf32, #tpu.memory_space<vmem>>
      %248 = tpu.memref_squeeze %247 : memref<1x32xf32, #tpu.memory_space<vmem>> -> memref<32xf32, #tpu.memory_space<vmem>>
      %249 = tpu.memref_slice %arg9[%c0_i32_161] : memref<1x!tpu.dma_semaphore, #tpu.memory_space<semaphore_mem>> -> memref<1x!tpu.dma_semaphore, #tpu.memory_space<semaphore_mem>>
      %250 = tpu.memref_squeeze %249 : memref<1x!tpu.dma_semaphore, #tpu.memory_space<semaphore_mem>> -> memref<!tpu.dma_semaphore, #tpu.memory_space<semaphore_mem>>
      tpu.wait_dma2 semaphore(%250 : memref<!tpu.dma_semaphore, #tpu.memory_space<semaphore_mem>>) src(%246 : memref<32xf32, #tpu.memory_space<any>>) dst(%248 : memref<32xf32, #tpu.memory_space<vmem>>)
      %c0_i32_164 = arith.constant 0 : i32
      %c6_i32_165 = arith.constant 6 : i32
      %c0_i32_166 = arith.constant 0 : i32
      %c0_i32_167 = arith.constant 0 : i32
      %251 = tpu.memref_slice %arg4[%c0_i32_164, %c0_i32_167] : memref<32x32xf32, #tpu.memory_space<any>> -> memref<1x32xf32, #tpu.memory_space<any>>
      %252 = tpu.memref_squeeze %251 : memref<1x32xf32, #tpu.memory_space<any>> -> memref<32xf32, #tpu.memory_space<any>>
      %c0_i32_168 = arith.constant 0 : i32
      %253 = tpu.memref_slice %arg7[%c6_i32_165, %c0_i32_168] : memref<8x32xf32, #tpu.memory_space<vmem>> -> memref<1x32xf32, #tpu.memory_space<vmem>>
      %254 = tpu.memref_squeeze %253 : memref<1x32xf32, #tpu.memory_space<vmem>> -> memref<32xf32, #tpu.memory_space<vmem>>
      %255 = tpu.memref_slice %arg9[%c0_i32_166] : memref<1x!tpu.dma_semaphore, #tpu.memory_space<semaphore_mem>> -> memref<1x!tpu.dma_semaphore, #tpu.memory_space<semaphore_mem>>
      %256 = tpu.memref_squeeze %255 : memref<1x!tpu.dma_semaphore, #tpu.memory_space<semaphore_mem>> -> memref<!tpu.dma_semaphore, #tpu.memory_space<semaphore_mem>>
      tpu.wait_dma2 semaphore(%256 : memref<!tpu.dma_semaphore, #tpu.memory_space<semaphore_mem>>) src(%252 : memref<32xf32, #tpu.memory_space<any>>) dst(%254 : memref<32xf32, #tpu.memory_space<vmem>>)
      %c0_i32_169 = arith.constant 0 : i32
      %c7_i32_170 = arith.constant 7 : i32
      %c0_i32_171 = arith.constant 0 : i32
      %c0_i32_172 = arith.constant 0 : i32
      %257 = tpu.memref_slice %arg4[%c0_i32_169, %c0_i32_172] : memref<32x32xf32, #tpu.memory_space<any>> -> memref<1x32xf32, #tpu.memory_space<any>>
      %258 = tpu.memref_squeeze %257 : memref<1x32xf32, #tpu.memory_space<any>> -> memref<32xf32, #tpu.memory_space<any>>
      %c0_i32_173 = arith.constant 0 : i32
      %259 = tpu.memref_slice %arg7[%c7_i32_170, %c0_i32_173] : memref<8x32xf32, #tpu.memory_space<vmem>> -> memref<1x32xf32, #tpu.memory_space<vmem>>
      %260 = tpu.memref_squeeze %259 : memref<1x32xf32, #tpu.memory_space<vmem>> -> memref<32xf32, #tpu.memory_space<vmem>>
      %261 = tpu.memref_slice %arg9[%c0_i32_171] : memref<1x!tpu.dma_semaphore, #tpu.memory_space<semaphore_mem>> -> memref<1x!tpu.dma_semaphore, #tpu.memory_space<semaphore_mem>>
      %262 = tpu.memref_squeeze %261 : memref<1x!tpu.dma_semaphore, #tpu.memory_space<semaphore_mem>> -> memref<!tpu.dma_semaphore, #tpu.memory_space<semaphore_mem>>
      tpu.wait_dma2 semaphore(%262 : memref<!tpu.dma_semaphore, #tpu.memory_space<semaphore_mem>>) src(%258 : memref<32xf32, #tpu.memory_space<any>>) dst(%260 : memref<32xf32, #tpu.memory_space<vmem>>)
    } else {
    }
    %c8_i32 = arith.constant 8 : i32
    %3 = arith.muli %arg1, %c8_i32 : i32
    %c0_i32_1 = arith.constant 0 : i32
    %4 = arith.addi %3, %c0_i32_1 : i32
    %5 = arith.index_cast %4 : i32 to index
    %6 = memref.load %arg3[%5] : memref<8xi32, #tpu.memory_space<smem>>
    %c0_i32_2 = arith.constant 0 : i32
    %c0_i32_3 = arith.constant 0 : i32
    %c0_i32_4 = arith.constant 0 : i32
    %7 = tpu.memref_slice %arg5[%6, %c0_i32_4] : memref<101x32xf32, #tpu.memory_space<any>> -> memref<1x32xf32, #tpu.memory_space<any>>
    %8 = tpu.memref_squeeze %7 : memref<1x32xf32, #tpu.memory_space<any>> -> memref<32xf32, #tpu.memory_space<any>>
    %c0_i32_5 = arith.constant 0 : i32
    %9 = tpu.memref_slice %arg8[%c0_i32_2, %c0_i32_5] : memref<8x32xf32, #tpu.memory_space<vmem>> -> memref<1x32xf32, #tpu.memory_space<vmem>>
    %10 = tpu.memref_squeeze %9 : memref<1x32xf32, #tpu.memory_space<vmem>> -> memref<32xf32, #tpu.memory_space<vmem>>
    %11 = tpu.memref_slice %arg10[%c0_i32_3] : memref<1x!tpu.dma_semaphore, #tpu.memory_space<semaphore_mem>> -> memref<1x!tpu.dma_semaphore, #tpu.memory_space<semaphore_mem>>
    %12 = tpu.memref_squeeze %11 : memref<1x!tpu.dma_semaphore, #tpu.memory_space<semaphore_mem>> -> memref<!tpu.dma_semaphore, #tpu.memory_space<semaphore_mem>>
    tpu.enqueue_dma source(%8 : memref<32xf32, #tpu.memory_space<any>>) target(%10 : memref<32xf32, #tpu.memory_space<vmem>>) target_semaphore(%12 : memref<!tpu.dma_semaphore, #tpu.memory_space<semaphore_mem>>)
    %c8_i32_6 = arith.constant 8 : i32
    %13 = arith.muli %arg1, %c8_i32_6 : i32
    %c1_i32 = arith.constant 1 : i32
    %14 = arith.addi %13, %c1_i32 : i32
    %15 = arith.index_cast %14 : i32 to index
    %16 = memref.load %arg3[%15] : memref<8xi32, #tpu.memory_space<smem>>
    %c1_i32_7 = arith.constant 1 : i32
    %c0_i32_8 = arith.constant 0 : i32
    %c0_i32_9 = arith.constant 0 : i32
    %17 = tpu.memref_slice %arg5[%16, %c0_i32_9] : memref<101x32xf32, #tpu.memory_space<any>> -> memref<1x32xf32, #tpu.memory_space<any>>
    %18 = tpu.memref_squeeze %17 : memref<1x32xf32, #tpu.memory_space<any>> -> memref<32xf32, #tpu.memory_space<any>>
    %c0_i32_10 = arith.constant 0 : i32
    %19 = tpu.memref_slice %arg8[%c1_i32_7, %c0_i32_10] : memref<8x32xf32, #tpu.memory_space<vmem>> -> memref<1x32xf32, #tpu.memory_space<vmem>>
    %20 = tpu.memref_squeeze %19 : memref<1x32xf32, #tpu.memory_space<vmem>> -> memref<32xf32, #tpu.memory_space<vmem>>
    %21 = tpu.memref_slice %arg10[%c0_i32_8] : memref<1x!tpu.dma_semaphore, #tpu.memory_space<semaphore_mem>> -> memref<1x!tpu.dma_semaphore, #tpu.memory_space<semaphore_mem>>
    %22 = tpu.memref_squeeze %21 : memref<1x!tpu.dma_semaphore, #tpu.memory_space<semaphore_mem>> -> memref<!tpu.dma_semaphore, #tpu.memory_space<semaphore_mem>>
    tpu.enqueue_dma source(%18 : memref<32xf32, #tpu.memory_space<any>>) target(%20 : memref<32xf32, #tpu.memory_space<vmem>>) target_semaphore(%22 : memref<!tpu.dma_semaphore, #tpu.memory_space<semaphore_mem>>)
    %c8_i32_11 = arith.constant 8 : i32
    %23 = arith.muli %arg1, %c8_i32_11 : i32
    %c2_i32 = arith.constant 2 : i32
    %24 = arith.addi %23, %c2_i32 : i32
    %25 = arith.index_cast %24 : i32 to index
    %26 = memref.load %arg3[%25] : memref<8xi32, #tpu.memory_space<smem>>
    %c2_i32_12 = arith.constant 2 : i32
    %c0_i32_13 = arith.constant 0 : i32
    %c0_i32_14 = arith.constant 0 : i32
    %27 = tpu.memref_slice %arg5[%26, %c0_i32_14] : memref<101x32xf32, #tpu.memory_space<any>> -> memref<1x32xf32, #tpu.memory_space<any>>
    %28 = tpu.memref_squeeze %27 : memref<1x32xf32, #tpu.memory_space<any>> -> memref<32xf32, #tpu.memory_space<any>>
    %c0_i32_15 = arith.constant 0 : i32
    %29 = tpu.memref_slice %arg8[%c2_i32_12, %c0_i32_15] : memref<8x32xf32, #tpu.memory_space<vmem>> -> memref<1x32xf32, #tpu.memory_space<vmem>>
    %30 = tpu.memref_squeeze %29 : memref<1x32xf32, #tpu.memory_space<vmem>> -> memref<32xf32, #tpu.memory_space<vmem>>
    %31 = tpu.memref_slice %arg10[%c0_i32_13] : memref<1x!tpu.dma_semaphore, #tpu.memory_space<semaphore_mem>> -> memref<1x!tpu.dma_semaphore, #tpu.memory_space<semaphore_mem>>
    %32 = tpu.memref_squeeze %31 : memref<1x!tpu.dma_semaphore, #tpu.memory_space<semaphore_mem>> -> memref<!tpu.dma_semaphore, #tpu.memory_space<semaphore_mem>>
    tpu.enqueue_dma source(%28 : memref<32xf32, #tpu.memory_space<any>>) target(%30 : memref<32xf32, #tpu.memory_space<vmem>>) target_semaphore(%32 : memref<!tpu.dma_semaphore, #tpu.memory_space<semaphore_mem>>)
    %c8_i32_16 = arith.constant 8 : i32
    %33 = arith.muli %arg1, %c8_i32_16 : i32
    %c3_i32 = arith.constant 3 : i32
    %34 = arith.addi %33, %c3_i32 : i32
    %35 = arith.index_cast %34 : i32 to index
    %36 = memref.load %arg3[%35] : memref<8xi32, #tpu.memory_space<smem>>
    %c3_i32_17 = arith.constant 3 : i32
    %c0_i32_18 = arith.constant 0 : i32
    %c0_i32_19 = arith.constant 0 : i32
    %37 = tpu.memref_slice %arg5[%36, %c0_i32_19] : memref<101x32xf32, #tpu.memory_space<any>> -> memref<1x32xf32, #tpu.memory_space<any>>
    %38 = tpu.memref_squeeze %37 : memref<1x32xf32, #tpu.memory_space<any>> -> memref<32xf32, #tpu.memory_space<any>>
    %c0_i32_20 = arith.constant 0 : i32
    %39 = tpu.memref_slice %arg8[%c3_i32_17, %c0_i32_20] : memref<8x32xf32, #tpu.memory_space<vmem>> -> memref<1x32xf32, #tpu.memory_space<vmem>>
    %40 = tpu.memref_squeeze %39 : memref<1x32xf32, #tpu.memory_space<vmem>> -> memref<32xf32, #tpu.memory_space<vmem>>
    %41 = tpu.memref_slice %arg10[%c0_i32_18] : memref<1x!tpu.dma_semaphore, #tpu.memory_space<semaphore_mem>> -> memref<1x!tpu.dma_semaphore, #tpu.memory_space<semaphore_mem>>
    %42 = tpu.memref_squeeze %41 : memref<1x!tpu.dma_semaphore, #tpu.memory_space<semaphore_mem>> -> memref<!tpu.dma_semaphore, #tpu.memory_space<semaphore_mem>>
    tpu.enqueue_dma source(%38 : memref<32xf32, #tpu.memory_space<any>>) target(%40 : memref<32xf32, #tpu.memory_space<vmem>>) target_semaphore(%42 : memref<!tpu.dma_semaphore, #tpu.memory_space<semaphore_mem>>)
    %c8_i32_21 = arith.constant 8 : i32
    %43 = arith.muli %arg1, %c8_i32_21 : i32
    %c4_i32 = arith.constant 4 : i32
    %44 = arith.addi %43, %c4_i32 : i32
    %45 = arith.index_cast %44 : i32 to index
    %46 = memref.load %arg3[%45] : memref<8xi32, #tpu.memory_space<smem>>
    %c4_i32_22 = arith.constant 4 : i32
    %c0_i32_23 = arith.constant 0 : i32
    %c0_i32_24 = arith.constant 0 : i32
    %47 = tpu.memref_slice %arg5[%46, %c0_i32_24] : memref<101x32xf32, #tpu.memory_space<any>> -> memref<1x32xf32, #tpu.memory_space<any>>
    %48 = tpu.memref_squeeze %47 : memref<1x32xf32, #tpu.memory_space<any>> -> memref<32xf32, #tpu.memory_space<any>>
    %c0_i32_25 = arith.constant 0 : i32
    %49 = tpu.memref_slice %arg8[%c4_i32_22, %c0_i32_25] : memref<8x32xf32, #tpu.memory_space<vmem>> -> memref<1x32xf32, #tpu.memory_space<vmem>>
    %50 = tpu.memref_squeeze %49 : memref<1x32xf32, #tpu.memory_space<vmem>> -> memref<32xf32, #tpu.memory_space<vmem>>
    %51 = tpu.memref_slice %arg10[%c0_i32_23] : memref<1x!tpu.dma_semaphore, #tpu.memory_space<semaphore_mem>> -> memref<1x!tpu.dma_semaphore, #tpu.memory_space<semaphore_mem>>
    %52 = tpu.memref_squeeze %51 : memref<1x!tpu.dma_semaphore, #tpu.memory_space<semaphore_mem>> -> memref<!tpu.dma_semaphore, #tpu.memory_space<semaphore_mem>>
    tpu.enqueue_dma source(%48 : memref<32xf32, #tpu.memory_space<any>>) target(%50 : memref<32xf32, #tpu.memory_space<vmem>>) target_semaphore(%52 : memref<!tpu.dma_semaphore, #tpu.memory_space<semaphore_mem>>)
    %c8_i32_26 = arith.constant 8 : i32
    %53 = arith.muli %arg1, %c8_i32_26 : i32
    %c5_i32 = arith.constant 5 : i32
    %54 = arith.addi %53, %c5_i32 : i32
    %55 = arith.index_cast %54 : i32 to index
    %56 = memref.load %arg3[%55] : memref<8xi32, #tpu.memory_space<smem>>
    %c5_i32_27 = arith.constant 5 : i32
    %c0_i32_28 = arith.constant 0 : i32
    %c0_i32_29 = arith.constant 0 : i32
    %57 = tpu.memref_slice %arg5[%56, %c0_i32_29] : memref<101x32xf32, #tpu.memory_space<any>> -> memref<1x32xf32, #tpu.memory_space<any>>
    %58 = tpu.memref_squeeze %57 : memref<1x32xf32, #tpu.memory_space<any>> -> memref<32xf32, #tpu.memory_space<any>>
    %c0_i32_30 = arith.constant 0 : i32
    %59 = tpu.memref_slice %arg8[%c5_i32_27, %c0_i32_30] : memref<8x32xf32, #tpu.memory_space<vmem>> -> memref<1x32xf32, #tpu.memory_space<vmem>>
    %60 = tpu.memref_squeeze %59 : memref<1x32xf32, #tpu.memory_space<vmem>> -> memref<32xf32, #tpu.memory_space<vmem>>
    %61 = tpu.memref_slice %arg10[%c0_i32_28] : memref<1x!tpu.dma_semaphore, #tpu.memory_space<semaphore_mem>> -> memref<1x!tpu.dma_semaphore, #tpu.memory_space<semaphore_mem>>
    %62 = tpu.memref_squeeze %61 : memref<1x!tpu.dma_semaphore, #tpu.memory_space<semaphore_mem>> -> memref<!tpu.dma_semaphore, #tpu.memory_space<semaphore_mem>>
    tpu.enqueue_dma source(%58 : memref<32xf32, #tpu.memory_space<any>>) target(%60 : memref<32xf32, #tpu.memory_space<vmem>>) target_semaphore(%62 : memref<!tpu.dma_semaphore, #tpu.memory_space<semaphore_mem>>)
    %c8_i32_31 = arith.constant 8 : i32
    %63 = arith.muli %arg1, %c8_i32_31 : i32
    %c6_i32 = arith.constant 6 : i32
    %64 = arith.addi %63, %c6_i32 : i32
    %65 = arith.index_cast %64 : i32 to index
    %66 = memref.load %arg3[%65] : memref<8xi32, #tpu.memory_space<smem>>
    %c6_i32_32 = arith.constant 6 : i32
    %c0_i32_33 = arith.constant 0 : i32
    %c0_i32_34 = arith.constant 0 : i32
    %67 = tpu.memref_slice %arg5[%66, %c0_i32_34] : memref<101x32xf32, #tpu.memory_space<any>> -> memref<1x32xf32, #tpu.memory_space<any>>
    %68 = tpu.memref_squeeze %67 : memref<1x32xf32, #tpu.memory_space<any>> -> memref<32xf32, #tpu.memory_space<any>>
    %c0_i32_35 = arith.constant 0 : i32
    %69 = tpu.memref_slice %arg8[%c6_i32_32, %c0_i32_35] : memref<8x32xf32, #tpu.memory_space<vmem>> -> memref<1x32xf32, #tpu.memory_space<vmem>>
    %70 = tpu.memref_squeeze %69 : memref<1x32xf32, #tpu.memory_space<vmem>> -> memref<32xf32, #tpu.memory_space<vmem>>
    %71 = tpu.memref_slice %arg10[%c0_i32_33] : memref<1x!tpu.dma_semaphore, #tpu.memory_space<semaphore_mem>> -> memref<1x!tpu.dma_semaphore, #tpu.memory_space<semaphore_mem>>
    %72 = tpu.memref_squeeze %71 : memref<1x!tpu.dma_semaphore, #tpu.memory_space<semaphore_mem>> -> memref<!tpu.dma_semaphore, #tpu.memory_space<semaphore_mem>>
    tpu.enqueue_dma source(%68 : memref<32xf32, #tpu.memory_space<any>>) target(%70 : memref<32xf32, #tpu.memory_space<vmem>>) target_semaphore(%72 : memref<!tpu.dma_semaphore, #tpu.memory_space<semaphore_mem>>)
    %c8_i32_36 = arith.constant 8 : i32
    %73 = arith.muli %arg1, %c8_i32_36 : i32
    %c7_i32 = arith.constant 7 : i32
    %74 = arith.addi %73, %c7_i32 : i32
    %75 = arith.index_cast %74 : i32 to index
    %76 = memref.load %arg3[%75] : memref<8xi32, #tpu.memory_space<smem>>
    %c7_i32_37 = arith.constant 7 : i32
    %c0_i32_38 = arith.constant 0 : i32
    %c0_i32_39 = arith.constant 0 : i32
    %77 = tpu.memref_slice %arg5[%76, %c0_i32_39] : memref<101x32xf32, #tpu.memory_space<any>> -> memref<1x32xf32, #tpu.memory_space<any>>
    %78 = tpu.memref_squeeze %77 : memref<1x32xf32, #tpu.memory_space<any>> -> memref<32xf32, #tpu.memory_space<any>>
    %c0_i32_40 = arith.constant 0 : i32
    %79 = tpu.memref_slice %arg8[%c7_i32_37, %c0_i32_40] : memref<8x32xf32, #tpu.memory_space<vmem>> -> memref<1x32xf32, #tpu.memory_space<vmem>>
    %80 = tpu.memref_squeeze %79 : memref<1x32xf32, #tpu.memory_space<vmem>> -> memref<32xf32, #tpu.memory_space<vmem>>
    %81 = tpu.memref_slice %arg10[%c0_i32_38] : memref<1x!tpu.dma_semaphore, #tpu.memory_space<semaphore_mem>> -> memref<1x!tpu.dma_semaphore, #tpu.memory_space<semaphore_mem>>
    %82 = tpu.memref_squeeze %81 : memref<1x!tpu.dma_semaphore, #tpu.memory_space<semaphore_mem>> -> memref<!tpu.dma_semaphore, #tpu.memory_space<semaphore_mem>>
    tpu.enqueue_dma source(%78 : memref<32xf32, #tpu.memory_space<any>>) target(%80 : memref<32xf32, #tpu.memory_space<vmem>>) target_semaphore(%82 : memref<!tpu.dma_semaphore, #tpu.memory_space<semaphore_mem>>)
    %c0_i32_41 = arith.constant 0 : i32
    %c0_i32_42 = arith.constant 0 : i32
    %c0_i32_43 = arith.constant 0 : i32
    %c0_i32_44 = arith.constant 0 : i32
    %83 = tpu.memref_slice %arg5[%c0_i32_41, %c0_i32_44] : memref<101x32xf32, #tpu.memory_space<any>> -> memref<1x32xf32, #tpu.memory_space<any>>
    %84 = tpu.memref_squeeze %83 : memref<1x32xf32, #tpu.memory_space<any>> -> memref<32xf32, #tpu.memory_space<any>>
    %c0_i32_45 = arith.constant 0 : i32
    %85 = tpu.memref_slice %arg8[%c0_i32_42, %c0_i32_45] : memref<8x32xf32, #tpu.memory_space<vmem>> -> memref<1x32xf32, #tpu.memory_space<vmem>>
    %86 = tpu.memref_squeeze %85 : memref<1x32xf32, #tpu.memory_space<vmem>> -> memref<32xf32, #tpu.memory_space<vmem>>
    %87 = tpu.memref_slice %arg10[%c0_i32_43] : memref<1x!tpu.dma_semaphore, #tpu.memory_space<semaphore_mem>> -> memref<1x!tpu.dma_semaphore, #tpu.memory_space<semaphore_mem>>
    %88 = tpu.memref_squeeze %87 : memref<1x!tpu.dma_semaphore, #tpu.memory_space<semaphore_mem>> -> memref<!tpu.dma_semaphore, #tpu.memory_space<semaphore_mem>>
    tpu.wait_dma2 semaphore(%88 : memref<!tpu.dma_semaphore, #tpu.memory_space<semaphore_mem>>) src(%84 : memref<32xf32, #tpu.memory_space<any>>) dst(%86 : memref<32xf32, #tpu.memory_space<vmem>>)
    %c0_i32_46 = arith.constant 0 : i32
    %c1_i32_47 = arith.constant 1 : i32
    %c0_i32_48 = arith.constant 0 : i32
    %c0_i32_49 = arith.constant 0 : i32
    %89 = tpu.memref_slice %arg5[%c0_i32_46, %c0_i32_49] : memref<101x32xf32, #tpu.memory_space<any>> -> memref<1x32xf32, #tpu.memory_space<any>>
    %90 = tpu.memref_squeeze %89 : memref<1x32xf32, #tpu.memory_space<any>> -> memref<32xf32, #tpu.memory_space<any>>
    %c0_i32_50 = arith.constant 0 : i32
    %91 = tpu.memref_slice %arg8[%c1_i32_47, %c0_i32_50] : memref<8x32xf32, #tpu.memory_space<vmem>> -> memref<1x32xf32, #tpu.memory_space<vmem>>
    %92 = tpu.memref_squeeze %91 : memref<1x32xf32, #tpu.memory_space<vmem>> -> memref<32xf32, #tpu.memory_space<vmem>>
    %93 = tpu.memref_slice %arg10[%c0_i32_48] : memref<1x!tpu.dma_semaphore, #tpu.memory_space<semaphore_mem>> -> memref<1x!tpu.dma_semaphore, #tpu.memory_space<semaphore_mem>>
    %94 = tpu.memref_squeeze %93 : memref<1x!tpu.dma_semaphore, #tpu.memory_space<semaphore_mem>> -> memref<!tpu.dma_semaphore, #tpu.memory_space<semaphore_mem>>
    tpu.wait_dma2 semaphore(%94 : memref<!tpu.dma_semaphore, #tpu.memory_space<semaphore_mem>>) src(%90 : memref<32xf32, #tpu.memory_space<any>>) dst(%92 : memref<32xf32, #tpu.memory_space<vmem>>)
    %c0_i32_51 = arith.constant 0 : i32
    %c2_i32_52 = arith.constant 2 : i32
    %c0_i32_53 = arith.constant 0 : i32
    %c0_i32_54 = arith.constant 0 : i32
    %95 = tpu.memref_slice %arg5[%c0_i32_51, %c0_i32_54] : memref<101x32xf32, #tpu.memory_space<any>> -> memref<1x32xf32, #tpu.memory_space<any>>
    %96 = tpu.memref_squeeze %95 : memref<1x32xf32, #tpu.memory_space<any>> -> memref<32xf32, #tpu.memory_space<any>>
    %c0_i32_55 = arith.constant 0 : i32
    %97 = tpu.memref_slice %arg8[%c2_i32_52, %c0_i32_55] : memref<8x32xf32, #tpu.memory_space<vmem>> -> memref<1x32xf32, #tpu.memory_space<vmem>>
    %98 = tpu.memref_squeeze %97 : memref<1x32xf32, #tpu.memory_space<vmem>> -> memref<32xf32, #tpu.memory_space<vmem>>
    %99 = tpu.memref_slice %arg10[%c0_i32_53] : memref<1x!tpu.dma_semaphore, #tpu.memory_space<semaphore_mem>> -> memref<1x!tpu.dma_semaphore, #tpu.memory_space<semaphore_mem>>
    %100 = tpu.memref_squeeze %99 : memref<1x!tpu.dma_semaphore, #tpu.memory_space<semaphore_mem>> -> memref<!tpu.dma_semaphore, #tpu.memory_space<semaphore_mem>>
    tpu.wait_dma2 semaphore(%100 : memref<!tpu.dma_semaphore, #tpu.memory_space<semaphore_mem>>) src(%96 : memref<32xf32, #tpu.memory_space<any>>) dst(%98 : memref<32xf32, #tpu.memory_space<vmem>>)
    %c0_i32_56 = arith.constant 0 : i32
    %c3_i32_57 = arith.constant 3 : i32
    %c0_i32_58 = arith.constant 0 : i32
    %c0_i32_59 = arith.constant 0 : i32
    %101 = tpu.memref_slice %arg5[%c0_i32_56, %c0_i32_59] : memref<101x32xf32, #tpu.memory_space<any>> -> memref<1x32xf32, #tpu.memory_space<any>>
    %102 = tpu.memref_squeeze %101 : memref<1x32xf32, #tpu.memory_space<any>> -> memref<32xf32, #tpu.memory_space<any>>
    %c0_i32_60 = arith.constant 0 : i32
    %103 = tpu.memref_slice %arg8[%c3_i32_57, %c0_i32_60] : memref<8x32xf32, #tpu.memory_space<vmem>> -> memref<1x32xf32, #tpu.memory_space<vmem>>
    %104 = tpu.memref_squeeze %103 : memref<1x32xf32, #tpu.memory_space<vmem>> -> memref<32xf32, #tpu.memory_space<vmem>>
    %105 = tpu.memref_slice %arg10[%c0_i32_58] : memref<1x!tpu.dma_semaphore, #tpu.memory_space<semaphore_mem>> -> memref<1x!tpu.dma_semaphore, #tpu.memory_space<semaphore_mem>>
    %106 = tpu.memref_squeeze %105 : memref<1x!tpu.dma_semaphore, #tpu.memory_space<semaphore_mem>> -> memref<!tpu.dma_semaphore, #tpu.memory_space<semaphore_mem>>
    tpu.wait_dma2 semaphore(%106 : memref<!tpu.dma_semaphore, #tpu.memory_space<semaphore_mem>>) src(%102 : memref<32xf32, #tpu.memory_space<any>>) dst(%104 : memref<32xf32, #tpu.memory_space<vmem>>)
    %c0_i32_61 = arith.constant 0 : i32
    %c4_i32_62 = arith.constant 4 : i32
    %c0_i32_63 = arith.constant 0 : i32
    %c0_i32_64 = arith.constant 0 : i32
    %107 = tpu.memref_slice %arg5[%c0_i32_61, %c0_i32_64] : memref<101x32xf32, #tpu.memory_space<any>> -> memref<1x32xf32, #tpu.memory_space<any>>
    %108 = tpu.memref_squeeze %107 : memref<1x32xf32, #tpu.memory_space<any>> -> memref<32xf32, #tpu.memory_space<any>>
    %c0_i32_65 = arith.constant 0 : i32
    %109 = tpu.memref_slice %arg8[%c4_i32_62, %c0_i32_65] : memref<8x32xf32, #tpu.memory_space<vmem>> -> memref<1x32xf32, #tpu.memory_space<vmem>>
    %110 = tpu.memref_squeeze %109 : memref<1x32xf32, #tpu.memory_space<vmem>> -> memref<32xf32, #tpu.memory_space<vmem>>
    %111 = tpu.memref_slice %arg10[%c0_i32_63] : memref<1x!tpu.dma_semaphore, #tpu.memory_space<semaphore_mem>> -> memref<1x!tpu.dma_semaphore, #tpu.memory_space<semaphore_mem>>
    %112 = tpu.memref_squeeze %111 : memref<1x!tpu.dma_semaphore, #tpu.memory_space<semaphore_mem>> -> memref<!tpu.dma_semaphore, #tpu.memory_space<semaphore_mem>>
    tpu.wait_dma2 semaphore(%112 : memref<!tpu.dma_semaphore, #tpu.memory_space<semaphore_mem>>) src(%108 : memref<32xf32, #tpu.memory_space<any>>) dst(%110 : memref<32xf32, #tpu.memory_space<vmem>>)
    %c0_i32_66 = arith.constant 0 : i32
    %c5_i32_67 = arith.constant 5 : i32
    %c0_i32_68 = arith.constant 0 : i32
    %c0_i32_69 = arith.constant 0 : i32
    %113 = tpu.memref_slice %arg5[%c0_i32_66, %c0_i32_69] : memref<101x32xf32, #tpu.memory_space<any>> -> memref<1x32xf32, #tpu.memory_space<any>>
    %114 = tpu.memref_squeeze %113 : memref<1x32xf32, #tpu.memory_space<any>> -> memref<32xf32, #tpu.memory_space<any>>
    %c0_i32_70 = arith.constant 0 : i32
    %115 = tpu.memref_slice %arg8[%c5_i32_67, %c0_i32_70] : memref<8x32xf32, #tpu.memory_space<vmem>> -> memref<1x32xf32, #tpu.memory_space<vmem>>
    %116 = tpu.memref_squeeze %115 : memref<1x32xf32, #tpu.memory_space<vmem>> -> memref<32xf32, #tpu.memory_space<vmem>>
    %117 = tpu.memref_slice %arg10[%c0_i32_68] : memref<1x!tpu.dma_semaphore, #tpu.memory_space<semaphore_mem>> -> memref<1x!tpu.dma_semaphore, #tpu.memory_space<semaphore_mem>>
    %118 = tpu.memref_squeeze %117 : memref<1x!tpu.dma_semaphore, #tpu.memory_space<semaphore_mem>> -> memref<!tpu.dma_semaphore, #tpu.memory_space<semaphore_mem>>
    tpu.wait_dma2 semaphore(%118 : memref<!tpu.dma_semaphore, #tpu.memory_space<semaphore_mem>>) src(%114 : memref<32xf32, #tpu.memory_space<any>>) dst(%116 : memref<32xf32, #tpu.memory_space<vmem>>)
    %c0_i32_71 = arith.constant 0 : i32
    %c6_i32_72 = arith.constant 6 : i32
    %c0_i32_73 = arith.constant 0 : i32
    %c0_i32_74 = arith.constant 0 : i32
    %119 = tpu.memref_slice %arg5[%c0_i32_71, %c0_i32_74] : memref<101x32xf32, #tpu.memory_space<any>> -> memref<1x32xf32, #tpu.memory_space<any>>
    %120 = tpu.memref_squeeze %119 : memref<1x32xf32, #tpu.memory_space<any>> -> memref<32xf32, #tpu.memory_space<any>>
    %c0_i32_75 = arith.constant 0 : i32
    %121 = tpu.memref_slice %arg8[%c6_i32_72, %c0_i32_75] : memref<8x32xf32, #tpu.memory_space<vmem>> -> memref<1x32xf32, #tpu.memory_space<vmem>>
    %122 = tpu.memref_squeeze %121 : memref<1x32xf32, #tpu.memory_space<vmem>> -> memref<32xf32, #tpu.memory_space<vmem>>
    %123 = tpu.memref_slice %arg10[%c0_i32_73] : memref<1x!tpu.dma_semaphore, #tpu.memory_space<semaphore_mem>> -> memref<1x!tpu.dma_semaphore, #tpu.memory_space<semaphore_mem>>
    %124 = tpu.memref_squeeze %123 : memref<1x!tpu.dma_semaphore, #tpu.memory_space<semaphore_mem>> -> memref<!tpu.dma_semaphore, #tpu.memory_space<semaphore_mem>>
    tpu.wait_dma2 semaphore(%124 : memref<!tpu.dma_semaphore, #tpu.memory_space<semaphore_mem>>) src(%120 : memref<32xf32, #tpu.memory_space<any>>) dst(%122 : memref<32xf32, #tpu.memory_space<vmem>>)
    %c0_i32_76 = arith.constant 0 : i32
    %c7_i32_77 = arith.constant 7 : i32
    %c0_i32_78 = arith.constant 0 : i32
    %c0_i32_79 = arith.constant 0 : i32
    %125 = tpu.memref_slice %arg5[%c0_i32_76, %c0_i32_79] : memref<101x32xf32, #tpu.memory_space<any>> -> memref<1x32xf32, #tpu.memory_space<any>>
    %126 = tpu.memref_squeeze %125 : memref<1x32xf32, #tpu.memory_space<any>> -> memref<32xf32, #tpu.memory_space<any>>
    %c0_i32_80 = arith.constant 0 : i32
    %127 = tpu.memref_slice %arg8[%c7_i32_77, %c0_i32_80] : memref<8x32xf32, #tpu.memory_space<vmem>> -> memref<1x32xf32, #tpu.memory_space<vmem>>
    %128 = tpu.memref_squeeze %127 : memref<1x32xf32, #tpu.memory_space<vmem>> -> memref<32xf32, #tpu.memory_space<vmem>>
    %129 = tpu.memref_slice %arg10[%c0_i32_78] : memref<1x!tpu.dma_semaphore, #tpu.memory_space<semaphore_mem>> -> memref<1x!tpu.dma_semaphore, #tpu.memory_space<semaphore_mem>>
    %130 = tpu.memref_squeeze %129 : memref<1x!tpu.dma_semaphore, #tpu.memory_space<semaphore_mem>> -> memref<!tpu.dma_semaphore, #tpu.memory_space<semaphore_mem>>
    tpu.wait_dma2 semaphore(%130 : memref<!tpu.dma_semaphore, #tpu.memory_space<semaphore_mem>>) src(%126 : memref<32xf32, #tpu.memory_space<any>>) dst(%128 : memref<32xf32, #tpu.memory_space<vmem>>)
    %c0 = arith.constant 0 : index
    %c0_81 = arith.constant 0 : index
    %131 = vector.load %arg7[%c0, %c0_81] : memref<8x32xf32, #tpu.memory_space<vmem>>, vector<8x32xf32>
    %c0_82 = arith.constant 0 : index
    %c0_83 = arith.constant 0 : index
    %132 = vector.load %arg8[%c0_82, %c0_83] : memref<8x32xf32, #tpu.memory_space<vmem>>, vector<8x32xf32>
    %cst = arith.constant dense<0.000000e+00> : vector<8x8xf32>
    %133 = tpu.matmul %131, %132, %cst {dimension_numbers = #tpu.dot_dimension_numbers<[1], [1], [0], [0], [0, 0, 1, 0], [], []>} : vector<8x32xf32>, vector<8x32xf32>, vector<8x8xf32> -> vector<8x8xf32>
    %c0_84 = arith.constant 0 : index
    %c0_85 = arith.constant 0 : index
    %134 = vector.load %arg6[%c0_84, %c0_85] : memref<8x8xf32, #tpu.memory_space<vmem>>, vector<8x8xf32>
    tpu.vector_store %arg6[%c0_84, %c0_85], %133 {strides = array<i32>} : memref<8x8xf32, #tpu.memory_space<vmem>>, vector<8x8xf32>,
    return
  }
  func.func @transform_2(%arg0: i32, %arg1: i32, %arg2: memref<8xi32, #tpu.memory_space<smem>>, %arg3: memref<8xi32, #tpu.memory_space<smem>>) -> (i32, i32) {
    %c0_i32 = arith.constant 0 : i32
    return %arg0, %arg1 : i32, i32
  }
}

</mosaic_0001>

<llo_original>
// kernel: tpu_custom_call.1
$region0: #{tpu_custom_call.1}
  #allocation0 [shape = 'u32[]', space=smem, size = 0x4, offset = 0x4, fixed_abs, tag = 'smem constant byte address 0x4 - core index']
  #allocation1 [shape = 'u32[144,128]{1,0:T(1,128)}', space=vmem, size = 0x12000, scoped, tag = 'internal scratch']
  #allocation2 [shape = 'f32[8,32]{1,0:T(8,128)}', space=vmem, size = 0x1000, scoped, tag = 'scratch operand']
  #allocation3 [shape = 'f32[8,32]{1,0:T(8,128)}', space=vmem, size = 0x1000, scoped, tag = 'scratch operand']
  #allocation4 [shape = 's32[1]{0}', space=sflag, size = 0x4, scoped, tag = 'scratch operand']
  #allocation5 [shape = 's32[1]{0}', space=sflag, size = 0x4, scoped, tag = 'scratch operand']
  #allocation6 [shape = 's32[1]{0}', space=sflag, size = 0x4, scoped, tag = 'scoped memory for tpu_custom_call.1']
  #allocation7 [shape = 'u8[512]{0}', space=smem, size = 0x200, scoped, tag = 'prefetched SMEM operand 0']
  #allocation8 [shape = 'u8[512]{0}', space=smem, size = 0x200, scoped, tag = 'prefetched SMEM operand 1']
  #allocation11 [shape = 's32[]', space=sflag, size = 0x4, offset = 0, fixed_abs, tag = 'sflag constant byte address 0x0 - dummy sync flag']
  #allocation12 [shape = 's32[]', space=sflag, size = 0x4, offset = 0, fixed_abs, tag = 'sflag constant byte address 0x0 - dummy sync flag']
  #allocation13 [shape = 's32[]', space=sflag, size = 0x4, offset = 0, fixed_abs, tag = 'sflag constant byte address 0x0 - dummy sync flag']
  #allocation14 [shape = 's32[]', space=sflag, size = 0x4, offset = 0, fixed_abs, tag = 'sflag constant byte address 0x0 - dummy sync flag']
  #allocation15 [shape = 's32[]', space=sflag, size = 0x4, offset = 0, fixed_abs, tag = 'sflag constant byte address 0x0 - dummy sync flag']
  #allocation16 [shape = 's32[]', space=sflag, size = 0x4, offset = 0, fixed_abs, tag = 'sflag constant byte address 0x0 - dummy sync flag']
  #allocation17 [shape = 's32[]', space=sflag, size = 0x4, offset = 0, fixed_abs, tag = 'sflag constant byte address 0x0 - dummy sync flag']
  #allocation18 [shape = 's32[]', space=sflag, size = 0x4, offset = 0, fixed_abs, tag = 'sflag constant byte address 0x0 - dummy sync flag']
  #allocation19 [shape = 's32[]', space=sflag, size = 0x4, offset = 0, fixed_abs, tag = 'sflag constant byte address 0x0 - dummy sync flag']
  #allocation20 [shape = 's32[]', space=sflag, size = 0x4, offset = 0, fixed_abs, tag = 'sflag constant byte address 0x0 - dummy sync flag']
  #allocation21 [shape = 's32[]', space=sflag, size = 0x4, offset = 0, fixed_abs, tag = 'sflag constant byte address 0x0 - dummy sync flag']
  #allocation22 [shape = 's32[]', space=sflag, size = 0x4, offset = 0, fixed_abs, tag = 'sflag constant byte address 0x0 - dummy sync flag']
  #allocation23 [shape = 's32[]', space=sflag, size = 0x4, offset = 0, fixed_abs, tag = 'sflag constant byte address 0x0 - dummy sync flag']
  #allocation24 [shape = 's32[]', space=sflag, size = 0x4, offset = 0, fixed_abs, tag = 'sflag constant byte address 0x0 - dummy sync flag']
  #allocation25 [shape = 's32[]', space=sflag, size = 0x4, offset = 0, fixed_abs, tag = 'sflag constant byte address 0x0 - dummy sync flag']
  #allocation26 [shape = 's32[]', space=sflag, size = 0x4, offset = 0, fixed_abs, tag = 'sflag constant byte address 0x0 - dummy sync flag']
  %s0 = inlined_call_operand.vmem [shape: s32[8], index: 0, kind: input, shape index: {}]
  %s1 = inlined_call_operand.vmem [shape: s32[8], index: 1, kind: input, shape index: {}]
  %s2 = inlined_call_operand.vmem [shape: f32[32,32], index: 2, kind: input, shape index: {}]
  %s3 = inlined_call_operand.vmem [shape: f32[101,32], index: 3, kind: input, shape index: {}]
  %s4 = inlined_call_operand.hbm [shape: f32[8,8], index: 4, kind: output, shape index: {}]
  %s5 = sld [smem:[#allocation0]]
  $region494: #{tpu_custom_call.1} parent=0
    _
  %s7 = ssub.s32 1, %s5
  %s8 = scalar_select 0, %s7, %s5
  %s9 = sshll.u32 %s0, 4
  %s10 = int_to_ptr.vmem [resolvable:$true] %s9
  %12 = dma.vmem_to_smem %s10, 16, [#allocation7], [#allocation6]
  %s13 = sshll.u32 %s1, 4
  %s14 = int_to_ptr.vmem [resolvable:$true] %s13
  %16 = dma.vmem_to_smem %s14, 16, [#allocation8], [#allocation6]
  %17 = dma.done [#allocation6], 32
  %18 = sfence
  $region1: #{tpu_custom_call.1} parent=0
    #allocation9 [shape = 'u8[4096]{0}', space=vmem, size = 0x1000, scoped, tag = 'output window, operand 0, single buffered']
    #allocation10 [shape = 's32[1]{0}', space=sflag, size = 0x4, scoped, tag = 'scoped memory for tpu_custom_call.1']
    %19 = vsyncpa [#allocation10], 0
    %p20 = scmp.eq.s32.totalorder 0, 0
    // Predicated region
    $region2: #{tpu_custom_call.1} parent=1 // pred_check
      %p21 = pneg %p20
    $region3: #{tpu_custom_call.1} parent=1 // pred_check_branch
      %23 = sbr.rel (%p21) target = $region5
    $region4: #{tpu_custom_call.1} parent=1 // pred_region
      %s24 = smul.u32 0, 8
      %s25 = sld [smem:[#allocation7 + %s24]]
      %s26 = scalar_lea.vmem %s2, %s25
      %p28 = scmp.lt.u32.totalorder 1, 8
      %p29 = pneg %p28
      // Predicated region
      $region6: #{tpu_custom_call.1} parent=4 // pred_check
        _
      $region7: #{tpu_custom_call.1} parent=4 // pred_check_branch
        %31 = sbr.rel (%p28) target = $region9
      $region8: #{tpu_custom_call.1} parent=4 // pred_region
        %s47 = sand.u32 1, 7
        %p48 = scmp.eq.s32.totalorder %s47, 0
        %p49 = pneg %p48
        // Predicated region
        $region21: #{tpu_custom_call.1} parent=8 // pred_check
          _
        $region22: #{tpu_custom_call.1} parent=8 // pred_check_branch
          %51 = sbr.rel (%p48) target = $region24
        $region23: #{tpu_custom_call.1} parent=8 // pred_region
          %s52 = sand.u32 1, 7
          %s53 = ssub.s32 1, %s52
          %s54 = scalar_lea.vmem %s26, %s53
          %s55 = ssub.s32 1, %s52
          %s56 = scalar_lea.vmem [#allocation2], %s55
          %s57 = sshll.u32 1, %s52
          %s58 = ssub.s32 %s57, 1
          loop: start=0, step=1, limit=1
          $region25: #{tpu_custom_call.1} parent=23 // loop_pre_header
            _
          $region26: #{tpu_custom_call.1} parent=23 // loop_header
            %s60 = sphi 0, %s64
            %p61 = scmp.ge.s32.totalorder %s60, 1
            %s65 = sphi %s54, %s54
            %s66 = sphi %s56, %s56
          $region27: #{tpu_custom_call.1} parent=23 // loop_header_branch
            %63 = sbr.rel (%p61) target = $region31
          $region28: #{tpu_custom_call.1} parent=23 // loop_body
            %v67 = vld [vmem:[%s65] sm:%s58]
            %68 = vst [vmem:[%s66] sm:%s58] %v67
          $region29: #{tpu_custom_call.1} parent=23 // loop_footer
            %s64 = sadd.s32 1, %s60
          $region30: #{tpu_custom_call.1} parent=23 // loop_footer_branch
            %59 = sbr.rel target = $region26
          $region31: #{tpu_custom_call.1} parent=23 // loop_exit
            _
        $region24: #{tpu_custom_call.1} parent=8 // pred_fallthru
          _
      $region9: #{tpu_custom_call.1} parent=4 // pred_fallthru
        _
      // Predicated region
      $region10: #{tpu_custom_call.1} parent=4 // pred_check
        %p32 = pneg %p28
      $region11: #{tpu_custom_call.1} parent=4 // pred_check_branch
        %34 = sbr.rel (%p32) target = $region13
      $region12: #{tpu_custom_call.1} parent=4 // pred_region
        %s35 = sshll.u32 1, 1
        %s36 = ssub.s32 %s35, 1
        loop: start=0, step=1, limit=1
        $region14: #{tpu_custom_call.1} parent=12 // loop_pre_header
          _
        $region15: #{tpu_custom_call.1} parent=12 // loop_header
          %s38 = sphi 0, %s42
          %p39 = scmp.ge.s32.totalorder %s38, 1
          %s43 = sphi %s26, %s26
          %s44 = sphi [#allocation2], [#allocation2]
        $region16: #{tpu_custom_call.1} parent=12 // loop_header_branch
          %41 = sbr.rel (%p39) target = $region20
        $region17: #{tpu_custom_call.1} parent=12 // loop_body
          %v45 = vld [vmem:[%s43] sm:%s36]
          %46 = vst [vmem:[%s44] sm:%s36] %v45
        $region18: #{tpu_custom_call.1} parent=12 // loop_footer
          %s42 = sadd.s32 1, %s38
        $region19: #{tpu_custom_call.1} parent=12 // loop_footer_branch
          %37 = sbr.rel target = $region15
        $region20: #{tpu_custom_call.1} parent=12 // loop_exit
          _
      $region13: #{tpu_custom_call.1} parent=4 // pred_fallthru
        _
      // Predicated region
      $region32: #{tpu_custom_call.1} parent=4 // pred_check
        _
      $region33: #{tpu_custom_call.1} parent=4 // pred_check_branch
        %71 = sbr.rel (0) target = $region35
      $region34: #{tpu_custom_call.1} parent=4 // pred_region
        %72 = vsyncadd [#allocation4], 16
      $region35: #{tpu_custom_call.1} parent=4 // pred_fallthru
        _
      %s73 = sadd.s32 %s24, 1
      %s74 = sld [smem:[#allocation7 + %s73]]
      %s75 = scalar_lea.vmem %s2, %s74
      %s76 = scalar_lea.vmem [#allocation2], 1
      %p78 = scmp.lt.u32.totalorder 1, 8
      %p79 = pneg %p78
      // Predicated region
      $region36: #{tpu_custom_call.1} parent=4 // pred_check
        _
      $region37: #{tpu_custom_call.1} parent=4 // pred_check_branch
        %81 = sbr.rel (%p78) target = $region39
      $region38: #{tpu_custom_call.1} parent=4 // pred_region
        %s97 = sand.u32 1, 7
        %p98 = scmp.eq.s32.totalorder %s97, 0
        %p99 = pneg %p98
        // Predicated region
        $region51: #{tpu_custom_call.1} parent=38 // pred_check
          _
        $region52: #{tpu_custom_call.1} parent=38 // pred_check_branch
          %101 = sbr.rel (%p98) target = $region54
        $region53: #{tpu_custom_call.1} parent=38 // pred_region
          %s102 = sand.u32 1, 7
          %s103 = ssub.s32 1, %s102
          %s104 = scalar_lea.vmem %s75, %s103
          %s105 = ssub.s32 1, %s102
          %s106 = scalar_lea.vmem %s76, %s105 [#allocation2]
          %s107 = sshll.u32 1, %s102
          %s108 = ssub.s32 %s107, 1
          loop: start=0, step=1, limit=1
          $region55: #{tpu_custom_call.1} parent=53 // loop_pre_header
            _
          $region56: #{tpu_custom_call.1} parent=53 // loop_header
            %s110 = sphi 0, %s114
            %p111 = scmp.ge.s32.totalorder %s110, 1
            %s115 = sphi %s104, %s104
            %s116 = sphi %s106, %s106
          $region57: #{tpu_custom_call.1} parent=53 // loop_header_branch
            %113 = sbr.rel (%p111) target = $region61
          $region58: #{tpu_custom_call.1} parent=53 // loop_body
            %v117 = vld [vmem:[%s115] sm:%s108]
            %118 = vst [vmem:[%s116] sm:%s108] %v117
          $region59: #{tpu_custom_call.1} parent=53 // loop_footer
            %s114 = sadd.s32 1, %s110
          $region60: #{tpu_custom_call.1} parent=53 // loop_footer_branch
            %109 = sbr.rel target = $region56
          $region61: #{tpu_custom_call.1} parent=53 // loop_exit
            _
        $region54: #{tpu_custom_call.1} parent=38 // pred_fallthru
          _
      $region39: #{tpu_custom_call.1} parent=4 // pred_fallthru
        _
      // Predicated region
      $region40: #{tpu_custom_call.1} parent=4 // pred_check
        %p82 = pneg %p78
      $region41: #{tpu_custom_call.1} parent=4 // pred_check_branch
        %84 = sbr.rel (%p82) target = $region43
      $region42: #{tpu_custom_call.1} parent=4 // pred_region
        %s85 = sshll.u32 1, 1
        %s86 = ssub.s32 %s85, 1
        loop: start=0, step=1, limit=1
        $region44: #{tpu_custom_call.1} parent=42 // loop_pre_header
          _
        $region45: #{tpu_custom_call.1} parent=42 // loop_header
          %s88 = sphi 0, %s92
          %p89 = scmp.ge.s32.totalorder %s88, 1
          %s93 = sphi %s75, %s75
          %s94 = sphi %s76, %s76
        $region46: #{tpu_custom_call.1} parent=42 // loop_header_branch
          %91 = sbr.rel (%p89) target = $region50
        $region47: #{tpu_custom_call.1} parent=42 // loop_body
          %v95 = vld [vmem:[%s93] sm:%s86]
          %96 = vst [vmem:[%s94] sm:%s86] %v95
        $region48: #{tpu_custom_call.1} parent=42 // loop_footer
          %s92 = sadd.s32 1, %s88
        $region49: #{tpu_custom_call.1} parent=42 // loop_footer_branch
          %87 = sbr.rel target = $region45
        $region50: #{tpu_custom_call.1} parent=42 // loop_exit
          _
      $region43: #{tpu_custom_call.1} parent=4 // pred_fallthru
        _
      // Predicated region
      $region62: #{tpu_custom_call.1} parent=4 // pred_check
        _
      $region63: #{tpu_custom_call.1} parent=4 // pred_check_branch
        %121 = sbr.rel (0) target = $region65
      $region64: #{tpu_custom_call.1} parent=4 // pred_region
        %122 = vsyncadd [#allocation4], 16
      $region65: #{tpu_custom_call.1} parent=4 // pred_fallthru
        _
      %s123 = sadd.s32 %s24, 2
      %s124 = sld [smem:[#allocation7 + %s123]]
      %s125 = scalar_lea.vmem %s2, %s124
      %s126 = scalar_lea.vmem [#allocation2], 2
      %p128 = scmp.lt.u32.totalorder 1, 8
      %p129 = pneg %p128
      // Predicated region
      $region66: #{tpu_custom_call.1} parent=4 // pred_check
        _
      $region67: #{tpu_custom_call.1} parent=4 // pred_check_branch
        %131 = sbr.rel (%p128) target = $region69
      $region68: #{tpu_custom_call.1} parent=4 // pred_region
        %s147 = sand.u32 1, 7
        %p148 = scmp.eq.s32.totalorder %s147, 0
        %p149 = pneg %p148
        // Predicated region
        $region81: #{tpu_custom_call.1} parent=68 // pred_check
          _
        $region82: #{tpu_custom_call.1} parent=68 // pred_check_branch
          %151 = sbr.rel (%p148) target = $region84
        $region83: #{tpu_custom_call.1} parent=68 // pred_region
          %s152 = sand.u32 1, 7
          %s153 = ssub.s32 1, %s152
          %s154 = scalar_lea.vmem %s125, %s153
          %s155 = ssub.s32 1, %s152
          %s156 = scalar_lea.vmem %s126, %s155 [#allocation2]
          %s157 = sshll.u32 1, %s152
          %s158 = ssub.s32 %s157, 1
          loop: start=0, step=1, limit=1
          $region85: #{tpu_custom_call.1} parent=83 // loop_pre_header
            _
          $region86: #{tpu_custom_call.1} parent=83 // loop_header
            %s160 = sphi 0, %s164
            %p161 = scmp.ge.s32.totalorder %s160, 1
            %s165 = sphi %s154, %s154
            %s166 = sphi %s156, %s156
          $region87: #{tpu_custom_call.1} parent=83 // loop_header_branch
            %163 = sbr.rel (%p161) target = $region91
          $region88: #{tpu_custom_call.1} parent=83 // loop_body
            %v167 = vld [vmem:[%s165] sm:%s158]
            %168 = vst [vmem:[%s166] sm:%s158] %v167
          $region89: #{tpu_custom_call.1} parent=83 // loop_footer
            %s164 = sadd.s32 1, %s160
          $region90: #{tpu_custom_call.1} parent=83 // loop_footer_branch
            %159 = sbr.rel target = $region86
          $region91: #{tpu_custom_call.1} parent=83 // loop_exit
            _
        $region84: #{tpu_custom_call.1} parent=68 // pred_fallthru
          _
      $region69: #{tpu_custom_call.1} parent=4 // pred_fallthru
        _
      // Predicated region
      $region70: #{tpu_custom_call.1} parent=4 // pred_check
        %p132 = pneg %p128
      $region71: #{tpu_custom_call.1} parent=4 // pred_check_branch
        %134 = sbr.rel (%p132) target = $region73
      $region72: #{tpu_custom_call.1} parent=4 // pred_region
        %s135 = sshll.u32 1, 1
        %s136 = ssub.s32 %s135, 1
        loop: start=0, step=1, limit=1
        $region74: #{tpu_custom_call.1} parent=72 // loop_pre_header
          _
        $region75: #{tpu_custom_call.1} parent=72 // loop_header
          %s138 = sphi 0, %s142
          %p139 = scmp.ge.s32.totalorder %s138, 1
          %s143 = sphi %s125, %s125
          %s144 = sphi %s126, %s126
        $region76: #{tpu_custom_call.1} parent=72 // loop_header_branch
          %141 = sbr.rel (%p139) target = $region80
        $region77: #{tpu_custom_call.1} parent=72 // loop_body
          %v145 = vld [vmem:[%s143] sm:%s136]
          %146 = vst [vmem:[%s144] sm:%s136] %v145
        $region78: #{tpu_custom_call.1} parent=72 // loop_footer
          %s142 = sadd.s32 1, %s138
        $region79: #{tpu_custom_call.1} parent=72 // loop_footer_branch
          %137 = sbr.rel target = $region75
        $region80: #{tpu_custom_call.1} parent=72 // loop_exit
          _
      $region73: #{tpu_custom_call.1} parent=4 // pred_fallthru
        _
      // Predicated region
      $region92: #{tpu_custom_call.1} parent=4 // pred_check
        _
      $region93: #{tpu_custom_call.1} parent=4 // pred_check_branch
        %171 = sbr.rel (0) target = $region95
      $region94: #{tpu_custom_call.1} parent=4 // pred_region
        %172 = vsyncadd [#allocation4], 16
      $region95: #{tpu_custom_call.1} parent=4 // pred_fallthru
        _
      %s173 = sadd.s32 %s24, 3
      %s174 = sld [smem:[#allocation7 + %s173]]
      %s175 = scalar_lea.vmem %s2, %s174
      %s176 = scalar_lea.vmem [#allocation2], 3
      %p178 = scmp.lt.u32.totalorder 1, 8
      %p179 = pneg %p178
      // Predicated region
      $region96: #{tpu_custom_call.1} parent=4 // pred_check
        _
      $region97: #{tpu_custom_call.1} parent=4 // pred_check_branch
        %181 = sbr.rel (%p178) target = $region99
      $region98: #{tpu_custom_call.1} parent=4 // pred_region
        %s197 = sand.u32 1, 7
        %p198 = scmp.eq.s32.totalorder %s197, 0
        %p199 = pneg %p198
        // Predicated region
        $region111: #{tpu_custom_call.1} parent=98 // pred_check
          _
        $region112: #{tpu_custom_call.1} parent=98 // pred_check_branch
          %201 = sbr.rel (%p198) target = $region114
        $region113: #{tpu_custom_call.1} parent=98 // pred_region
          %s202 = sand.u32 1, 7
          %s203 = ssub.s32 1, %s202
          %s204 = scalar_lea.vmem %s175, %s203
          %s205 = ssub.s32 1, %s202
          %s206 = scalar_lea.vmem %s176, %s205 [#allocation2]
          %s207 = sshll.u32 1, %s202
          %s208 = ssub.s32 %s207, 1
          loop: start=0, step=1, limit=1
          $region115: #{tpu_custom_call.1} parent=113 // loop_pre_header
            _
          $region116: #{tpu_custom_call.1} parent=113 // loop_header
            %s210 = sphi 0, %s214
            %p211 = scmp.ge.s32.totalorder %s210, 1
            %s215 = sphi %s204, %s204
            %s216 = sphi %s206, %s206
          $region117: #{tpu_custom_call.1} parent=113 // loop_header_branch
            %213 = sbr.rel (%p211) target = $region121
          $region118: #{tpu_custom_call.1} parent=113 // loop_body
            %v217 = vld [vmem:[%s215] sm:%s208]
            %218 = vst [vmem:[%s216] sm:%s208] %v217
          $region119: #{tpu_custom_call.1} parent=113 // loop_footer
            %s214 = sadd.s32 1, %s210
          $region120: #{tpu_custom_call.1} parent=113 // loop_footer_branch
            %209 = sbr.rel target = $region116
          $region121: #{tpu_custom_call.1} parent=113 // loop_exit
            _
        $region114: #{tpu_custom_call.1} parent=98 // pred_fallthru
          _
      $region99: #{tpu_custom_call.1} parent=4 // pred_fallthru
        _
      // Predicated region
      $region100: #{tpu_custom_call.1} parent=4 // pred_check
        %p182 = pneg %p178
      $region101: #{tpu_custom_call.1} parent=4 // pred_check_branch
        %184 = sbr.rel (%p182) target = $region103
      $region102: #{tpu_custom_call.1} parent=4 // pred_region
        %s185 = sshll.u32 1, 1
        %s186 = ssub.s32 %s185, 1
        loop: start=0, step=1, limit=1
        $region104: #{tpu_custom_call.1} parent=102 // loop_pre_header
          _
        $region105: #{tpu_custom_call.1} parent=102 // loop_header
          %s188 = sphi 0, %s192
          %p189 = scmp.ge.s32.totalorder %s188, 1
          %s193 = sphi %s175, %s175
          %s194 = sphi %s176, %s176
        $region106: #{tpu_custom_call.1} parent=102 // loop_header_branch
          %191 = sbr.rel (%p189) target = $region110
        $region107: #{tpu_custom_call.1} parent=102 // loop_body
          %v195 = vld [vmem:[%s193] sm:%s186]
          %196 = vst [vmem:[%s194] sm:%s186] %v195
        $region108: #{tpu_custom_call.1} parent=102 // loop_footer
          %s192 = sadd.s32 1, %s188
        $region109: #{tpu_custom_call.1} parent=102 // loop_footer_branch
          %187 = sbr.rel target = $region105
        $region110: #{tpu_custom_call.1} parent=102 // loop_exit
          _
      $region103: #{tpu_custom_call.1} parent=4 // pred_fallthru
        _
      // Predicated region
      $region122: #{tpu_custom_call.1} parent=4 // pred_check
        _
      $region123: #{tpu_custom_call.1} parent=4 // pred_check_branch
        %221 = sbr.rel (0) target = $region125
      $region124: #{tpu_custom_call.1} parent=4 // pred_region
        %222 = vsyncadd [#allocation4], 16
      $region125: #{tpu_custom_call.1} parent=4 // pred_fallthru
        _
      %s223 = sadd.s32 %s24, 4
      %s224 = sld [smem:[#allocation7 + %s223]]
      %s225 = scalar_lea.vmem %s2, %s224
      %s226 = scalar_lea.vmem [#allocation2], 4
      %p228 = scmp.lt.u32.totalorder 1, 8
      %p229 = pneg %p228
      // Predicated region
      $region126: #{tpu_custom_call.1} parent=4 // pred_check
        _
      $region127: #{tpu_custom_call.1} parent=4 // pred_check_branch
        %231 = sbr.rel (%p228) target = $region129
      $region128: #{tpu_custom_call.1} parent=4 // pred_region
        %s247 = sand.u32 1, 7
        %p248 = scmp.eq.s32.totalorder %s247, 0
        %p249 = pneg %p248
        // Predicated region
        $region141: #{tpu_custom_call.1} parent=128 // pred_check
          _
        $region142: #{tpu_custom_call.1} parent=128 // pred_check_branch
          %251 = sbr.rel (%p248) target = $region144
        $region143: #{tpu_custom_call.1} parent=128 // pred_region
          %s252 = sand.u32 1, 7
          %s253 = ssub.s32 1, %s252
          %s254 = scalar_lea.vmem %s225, %s253
          %s255 = ssub.s32 1, %s252
          %s256 = scalar_lea.vmem %s226, %s255 [#allocation2]
          %s257 = sshll.u32 1, %s252
          %s258 = ssub.s32 %s257, 1
          loop: start=0, step=1, limit=1
          $region145: #{tpu_custom_call.1} parent=143 // loop_pre_header
            _
          $region146: #{tpu_custom_call.1} parent=143 // loop_header
            %s260 = sphi 0, %s264
            %p261 = scmp.ge.s32.totalorder %s260, 1
            %s265 = sphi %s254, %s254
            %s266 = sphi %s256, %s256
          $region147: #{tpu_custom_call.1} parent=143 // loop_header_branch
            %263 = sbr.rel (%p261) target = $region151
          $region148: #{tpu_custom_call.1} parent=143 // loop_body
            %v267 = vld [vmem:[%s265] sm:%s258]
            %268 = vst [vmem:[%s266] sm:%s258] %v267
          $region149: #{tpu_custom_call.1} parent=143 // loop_footer
            %s264 = sadd.s32 1, %s260
          $region150: #{tpu_custom_call.1} parent=143 // loop_footer_branch
            %259 = sbr.rel target = $region146
          $region151: #{tpu_custom_call.1} parent=143 // loop_exit
            _
        $region144: #{tpu_custom_call.1} parent=128 // pred_fallthru
          _
      $region129: #{tpu_custom_call.1} parent=4 // pred_fallthru
        _
      // Predicated region
      $region130: #{tpu_custom_call.1} parent=4 // pred_check
        %p232 = pneg %p228
      $region131: #{tpu_custom_call.1} parent=4 // pred_check_branch
        %234 = sbr.rel (%p232) target = $region133
      $region132: #{tpu_custom_call.1} parent=4 // pred_region
        %s235 = sshll.u32 1, 1
        %s236 = ssub.s32 %s235, 1
        loop: start=0, step=1, limit=1
        $region134: #{tpu_custom_call.1} parent=132 // loop_pre_header
          _
        $region135: #{tpu_custom_call.1} parent=132 // loop_header
          %s238 = sphi 0, %s242
          %p239 = scmp.ge.s32.totalorder %s238, 1
          %s243 = sphi %s225, %s225
          %s244 = sphi %s226, %s226
        $region136: #{tpu_custom_call.1} parent=132 // loop_header_branch
          %241 = sbr.rel (%p239) target = $region140
        $region137: #{tpu_custom_call.1} parent=132 // loop_body
          %v245 = vld [vmem:[%s243] sm:%s236]
          %246 = vst [vmem:[%s244] sm:%s236] %v245
        $region138: #{tpu_custom_call.1} parent=132 // loop_footer
          %s242 = sadd.s32 1, %s238
        $region139: #{tpu_custom_call.1} parent=132 // loop_footer_branch
          %237 = sbr.rel target = $region135
        $region140: #{tpu_custom_call.1} parent=132 // loop_exit
          _
      $region133: #{tpu_custom_call.1} parent=4 // pred_fallthru
        _
      // Predicated region
      $region152: #{tpu_custom_call.1} parent=4 // pred_check
        _
      $region153: #{tpu_custom_call.1} parent=4 // pred_check_branch
        %271 = sbr.rel (0) target = $region155
      $region154: #{tpu_custom_call.1} parent=4 // pred_region
        %272 = vsyncadd [#allocation4], 16
      $region155: #{tpu_custom_call.1} parent=4 // pred_fallthru
        _
      %s273 = sadd.s32 %s24, 5
      %s274 = sld [smem:[#allocation7 + %s273]]
      %s275 = scalar_lea.vmem %s2, %s274
      %s276 = scalar_lea.vmem [#allocation2], 5
      %p278 = scmp.lt.u32.totalorder 1, 8
      %p279 = pneg %p278
      // Predicated region
      $region156: #{tpu_custom_call.1} parent=4 // pred_check
        _
      $region157: #{tpu_custom_call.1} parent=4 // pred_check_branch
        %281 = sbr.rel (%p278) target = $region159
      $region158: #{tpu_custom_call.1} parent=4 // pred_region
        %s297 = sand.u32 1, 7
        %p298 = scmp.eq.s32.totalorder %s297, 0
        %p299 = pneg %p298
        // Predicated region
        $region171: #{tpu_custom_call.1} parent=158 // pred_check
          _
        $region172: #{tpu_custom_call.1} parent=158 // pred_check_branch
          %301 = sbr.rel (%p298) target = $region174
        $region173: #{tpu_custom_call.1} parent=158 // pred_region
          %s302 = sand.u32 1, 7
          %s303 = ssub.s32 1, %s302
          %s304 = scalar_lea.vmem %s275, %s303
          %s305 = ssub.s32 1, %s302
          %s306 = scalar_lea.vmem %s276, %s305 [#allocation2]
          %s307 = sshll.u32 1, %s302
          %s308 = ssub.s32 %s307, 1
          loop: start=0, step=1, limit=1
          $region175: #{tpu_custom_call.1} parent=173 // loop_pre_header
            _
          $region176: #{tpu_custom_call.1} parent=173 // loop_header
            %s310 = sphi 0, %s314
            %p311 = scmp.ge.s32.totalorder %s310, 1
            %s315 = sphi %s304, %s304
            %s316 = sphi %s306, %s306
          $region177: #{tpu_custom_call.1} parent=173 // loop_header_branch
            %313 = sbr.rel (%p311) target = $region181
          $region178: #{tpu_custom_call.1} parent=173 // loop_body
            %v317 = vld [vmem:[%s315] sm:%s308]
            %318 = vst [vmem:[%s316] sm:%s308] %v317
          $region179: #{tpu_custom_call.1} parent=173 // loop_footer
            %s314 = sadd.s32 1, %s310
          $region180: #{tpu_custom_call.1} parent=173 // loop_footer_branch
            %309 = sbr.rel target = $region176
          $region181: #{tpu_custom_call.1} parent=173 // loop_exit
            _
        $region174: #{tpu_custom_call.1} parent=158 // pred_fallthru
          _
      $region159: #{tpu_custom_call.1} parent=4 // pred_fallthru
        _
      // Predicated region
      $region160: #{tpu_custom_call.1} parent=4 // pred_check
        %p282 = pneg %p278
      $region161: #{tpu_custom_call.1} parent=4 // pred_check_branch
        %284 = sbr.rel (%p282) target = $region163
      $region162: #{tpu_custom_call.1} parent=4 // pred_region
        %s285 = sshll.u32 1, 1
        %s286 = ssub.s32 %s285, 1
        loop: start=0, step=1, limit=1
        $region164: #{tpu_custom_call.1} parent=162 // loop_pre_header
          _
        $region165: #{tpu_custom_call.1} parent=162 // loop_header
          %s288 = sphi 0, %s292
          %p289 = scmp.ge.s32.totalorder %s288, 1
          %s293 = sphi %s275, %s275
          %s294 = sphi %s276, %s276
        $region166: #{tpu_custom_call.1} parent=162 // loop_header_branch
          %291 = sbr.rel (%p289) target = $region170
        $region167: #{tpu_custom_call.1} parent=162 // loop_body
          %v295 = vld [vmem:[%s293] sm:%s286]
          %296 = vst [vmem:[%s294] sm:%s286] %v295
        $region168: #{tpu_custom_call.1} parent=162 // loop_footer
          %s292 = sadd.s32 1, %s288
        $region169: #{tpu_custom_call.1} parent=162 // loop_footer_branch
          %287 = sbr.rel target = $region165
        $region170: #{tpu_custom_call.1} parent=162 // loop_exit
          _
      $region163: #{tpu_custom_call.1} parent=4 // pred_fallthru
        _
      // Predicated region
      $region182: #{tpu_custom_call.1} parent=4 // pred_check
        _
      $region183: #{tpu_custom_call.1} parent=4 // pred_check_branch
        %321 = sbr.rel (0) target = $region185
      $region184: #{tpu_custom_call.1} parent=4 // pred_region
        %322 = vsyncadd [#allocation4], 16
      $region185: #{tpu_custom_call.1} parent=4 // pred_fallthru
        _
      %s323 = sadd.s32 %s24, 6
      %s324 = sld [smem:[#allocation7 + %s323]]
      %s325 = scalar_lea.vmem %s2, %s324
      %s326 = scalar_lea.vmem [#allocation2], 6
      %p328 = scmp.lt.u32.totalorder 1, 8
      %p329 = pneg %p328
      // Predicated region
      $region186: #{tpu_custom_call.1} parent=4 // pred_check
        _
      $region187: #{tpu_custom_call.1} parent=4 // pred_check_branch
        %331 = sbr.rel (%p328) target = $region189
      $region188: #{tpu_custom_call.1} parent=4 // pred_region
        %s347 = sand.u32 1, 7
        %p348 = scmp.eq.s32.totalorder %s347, 0
        %p349 = pneg %p348
        // Predicated region
        $region201: #{tpu_custom_call.1} parent=188 // pred_check
          _
        $region202: #{tpu_custom_call.1} parent=188 // pred_check_branch
          %351 = sbr.rel (%p348) target = $region204
        $region203: #{tpu_custom_call.1} parent=188 // pred_region
          %s352 = sand.u32 1, 7
          %s353 = ssub.s32 1, %s352
          %s354 = scalar_lea.vmem %s325, %s353
          %s355 = ssub.s32 1, %s352
          %s356 = scalar_lea.vmem %s326, %s355 [#allocation2]
          %s357 = sshll.u32 1, %s352
          %s358 = ssub.s32 %s357, 1
          loop: start=0, step=1, limit=1
          $region205: #{tpu_custom_call.1} parent=203 // loop_pre_header
            _
          $region206: #{tpu_custom_call.1} parent=203 // loop_header
            %s360 = sphi 0, %s364
            %p361 = scmp.ge.s32.totalorder %s360, 1
            %s365 = sphi %s354, %s354
            %s366 = sphi %s356, %s356
          $region207: #{tpu_custom_call.1} parent=203 // loop_header_branch
            %363 = sbr.rel (%p361) target = $region211
          $region208: #{tpu_custom_call.1} parent=203 // loop_body
            %v367 = vld [vmem:[%s365] sm:%s358]
            %368 = vst [vmem:[%s366] sm:%s358] %v367
          $region209: #{tpu_custom_call.1} parent=203 // loop_footer
            %s364 = sadd.s32 1, %s360
          $region210: #{tpu_custom_call.1} parent=203 // loop_footer_branch
            %359 = sbr.rel target = $region206
          $region211: #{tpu_custom_call.1} parent=203 // loop_exit
            _
        $region204: #{tpu_custom_call.1} parent=188 // pred_fallthru
          _
      $region189: #{tpu_custom_call.1} parent=4 // pred_fallthru
        _
      // Predicated region
      $region190: #{tpu_custom_call.1} parent=4 // pred_check
        %p332 = pneg %p328
      $region191: #{tpu_custom_call.1} parent=4 // pred_check_branch
        %334 = sbr.rel (%p332) target = $region193
      $region192: #{tpu_custom_call.1} parent=4 // pred_region
        %s335 = sshll.u32 1, 1
        %s336 = ssub.s32 %s335, 1
        loop: start=0, step=1, limit=1
        $region194: #{tpu_custom_call.1} parent=192 // loop_pre_header
          _
        $region195: #{tpu_custom_call.1} parent=192 // loop_header
          %s338 = sphi 0, %s342
          %p339 = scmp.ge.s32.totalorder %s338, 1
          %s343 = sphi %s325, %s325
          %s344 = sphi %s326, %s326
        $region196: #{tpu_custom_call.1} parent=192 // loop_header_branch
          %341 = sbr.rel (%p339) target = $region200
        $region197: #{tpu_custom_call.1} parent=192 // loop_body
          %v345 = vld [vmem:[%s343] sm:%s336]
          %346 = vst [vmem:[%s344] sm:%s336] %v345
        $region198: #{tpu_custom_call.1} parent=192 // loop_footer
          %s342 = sadd.s32 1, %s338
        $region199: #{tpu_custom_call.1} parent=192 // loop_footer_branch
          %337 = sbr.rel target = $region195
        $region200: #{tpu_custom_call.1} parent=192 // loop_exit
          _
      $region193: #{tpu_custom_call.1} parent=4 // pred_fallthru
        _
      // Predicated region
      $region212: #{tpu_custom_call.1} parent=4 // pred_check
        _
      $region213: #{tpu_custom_call.1} parent=4 // pred_check_branch
        %371 = sbr.rel (0) target = $region215
      $region214: #{tpu_custom_call.1} parent=4 // pred_region
        %372 = vsyncadd [#allocation4], 16
      $region215: #{tpu_custom_call.1} parent=4 // pred_fallthru
        _
      %s373 = sadd.s32 %s24, 7
      %s374 = sld [smem:[#allocation7 + %s373]]
      %s375 = scalar_lea.vmem %s2, %s374
      %s376 = scalar_lea.vmem [#allocation2], 7
      %p378 = scmp.lt.u32.totalorder 1, 8
      %p379 = pneg %p378
      // Predicated region
      $region216: #{tpu_custom_call.1} parent=4 // pred_check
        _
      $region217: #{tpu_custom_call.1} parent=4 // pred_check_branch
        %381 = sbr.rel (%p378) target = $region219
      $region218: #{tpu_custom_call.1} parent=4 // pred_region
        %s397 = sand.u32 1, 7
        %p398 = scmp.eq.s32.totalorder %s397, 0
        %p399 = pneg %p398
        // Predicated region
        $region231: #{tpu_custom_call.1} parent=218 // pred_check
          _
        $region232: #{tpu_custom_call.1} parent=218 // pred_check_branch
          %401 = sbr.rel (%p398) target = $region234
        $region233: #{tpu_custom_call.1} parent=218 // pred_region
          %s402 = sand.u32 1, 7
          %s403 = ssub.s32 1, %s402
          %s404 = scalar_lea.vmem %s375, %s403
          %s405 = ssub.s32 1, %s402
          %s406 = scalar_lea.vmem %s376, %s405 [#allocation2]
          %s407 = sshll.u32 1, %s402
          %s408 = ssub.s32 %s407, 1
          loop: start=0, step=1, limit=1
          $region235: #{tpu_custom_call.1} parent=233 // loop_pre_header
            _
          $region236: #{tpu_custom_call.1} parent=233 // loop_header
            %s410 = sphi 0, %s414
            %p411 = scmp.ge.s32.totalorder %s410, 1
            %s415 = sphi %s404, %s404
            %s416 = sphi %s406, %s406
          $region237: #{tpu_custom_call.1} parent=233 // loop_header_branch
            %413 = sbr.rel (%p411) target = $region241
          $region238: #{tpu_custom_call.1} parent=233 // loop_body
            %v417 = vld [vmem:[%s415] sm:%s408]
            %418 = vst [vmem:[%s416] sm:%s408] %v417
          $region239: #{tpu_custom_call.1} parent=233 // loop_footer
            %s414 = sadd.s32 1, %s410
          $region240: #{tpu_custom_call.1} parent=233 // loop_footer_branch
            %409 = sbr.rel target = $region236
          $region241: #{tpu_custom_call.1} parent=233 // loop_exit
            _
        $region234: #{tpu_custom_call.1} parent=218 // pred_fallthru
          _
      $region219: #{tpu_custom_call.1} parent=4 // pred_fallthru
        _
      // Predicated region
      $region220: #{tpu_custom_call.1} parent=4 // pred_check
        %p382 = pneg %p378
      $region221: #{tpu_custom_call.1} parent=4 // pred_check_branch
        %384 = sbr.rel (%p382) target = $region223
      $region222: #{tpu_custom_call.1} parent=4 // pred_region
        %s385 = sshll.u32 1, 1
        %s386 = ssub.s32 %s385, 1
        loop: start=0, step=1, limit=1
        $region224: #{tpu_custom_call.1} parent=222 // loop_pre_header
          _
        $region225: #{tpu_custom_call.1} parent=222 // loop_header
          %s388 = sphi 0, %s392
          %p389 = scmp.ge.s32.totalorder %s388, 1
          %s393 = sphi %s375, %s375
          %s394 = sphi %s376, %s376
        $region226: #{tpu_custom_call.1} parent=222 // loop_header_branch
          %391 = sbr.rel (%p389) target = $region230
        $region227: #{tpu_custom_call.1} parent=222 // loop_body
          %v395 = vld [vmem:[%s393] sm:%s386]
          %396 = vst [vmem:[%s394] sm:%s386] %v395
        $region228: #{tpu_custom_call.1} parent=222 // loop_footer
          %s392 = sadd.s32 1, %s388
        $region229: #{tpu_custom_call.1} parent=222 // loop_footer_branch
          %387 = sbr.rel target = $region225
        $region230: #{tpu_custom_call.1} parent=222 // loop_exit
          _
      $region223: #{tpu_custom_call.1} parent=4 // pred_fallthru
        _
      // Predicated region
      $region242: #{tpu_custom_call.1} parent=4 // pred_check
        _
      $region243: #{tpu_custom_call.1} parent=4 // pred_check_branch
        %421 = sbr.rel (0) target = $region245
      $region244: #{tpu_custom_call.1} parent=4 // pred_region
        %422 = vsyncadd [#allocation4], 16
      $region245: #{tpu_custom_call.1} parent=4 // pred_fallthru
        _
      %424 = dma.done [#allocation4], 16
      %426 = dma.done [#allocation4], 16
      %428 = dma.done [#allocation4], 16
      %430 = dma.done [#allocation4], 16
      %432 = dma.done [#allocation4], 16
      %434 = dma.done [#allocation4], 16
      %436 = dma.done [#allocation4], 16
      %438 = dma.done [#allocation4], 16
    $region5: #{tpu_custom_call.1} parent=1 // pred_fallthru
      _
    %s439 = smul.u32 0, 8
    %s440 = sld [smem:[#allocation8 + %s439]]
    %s441 = scalar_lea.vmem %s3, %s440
    %p443 = scmp.lt.u32.totalorder 1, 8
    %p444 = pneg %p443
    // Predicated region
    $region246: #{tpu_custom_call.1} parent=1 // pred_check
      _
    $region247: #{tpu_custom_call.1} parent=1 // pred_check_branch
      %446 = sbr.rel (%p443) target = $region249
    $region248: #{tpu_custom_call.1} parent=1 // pred_region
      %s462 = sand.u32 1, 7
      %p463 = scmp.eq.s32.totalorder %s462, 0
      %p464 = pneg %p463
      // Predicated region
      $region261: #{tpu_custom_call.1} parent=248 // pred_check
        _
      $region262: #{tpu_custom_call.1} parent=248 // pred_check_branch
        %466 = sbr.rel (%p463) target = $region264
      $region263: #{tpu_custom_call.1} parent=248 // pred_region
        %s467 = sand.u32 1, 7
        %s468 = ssub.s32 1, %s467
        %s469 = scalar_lea.vmem %s441, %s468
        %s470 = ssub.s32 1, %s467
        %s471 = scalar_lea.vmem [#allocation3], %s470
        %s472 = sshll.u32 1, %s467
        %s473 = ssub.s32 %s472, 1
        loop: start=0, step=1, limit=1
        $region265: #{tpu_custom_call.1} parent=263 // loop_pre_header
          _
        $region266: #{tpu_custom_call.1} parent=263 // loop_header
          %s475 = sphi 0, %s479
          %p476 = scmp.ge.s32.totalorder %s475, 1
          %s480 = sphi %s469, %s469
          %s481 = sphi %s471, %s471
        $region267: #{tpu_custom_call.1} parent=263 // loop_header_branch
          %478 = sbr.rel (%p476) target = $region271
        $region268: #{tpu_custom_call.1} parent=263 // loop_body
          %v482 = vld [vmem:[%s480] sm:%s473]
          %483 = vst [vmem:[%s481] sm:%s473] %v482
        $region269: #{tpu_custom_call.1} parent=263 // loop_footer
          %s479 = sadd.s32 1, %s475
        $region270: #{tpu_custom_call.1} parent=263 // loop_footer_branch
          %474 = sbr.rel target = $region266
        $region271: #{tpu_custom_call.1} parent=263 // loop_exit
          _
      $region264: #{tpu_custom_call.1} parent=248 // pred_fallthru
        _
    $region249: #{tpu_custom_call.1} parent=1 // pred_fallthru
      _
    // Predicated region
    $region250: #{tpu_custom_call.1} parent=1 // pred_check
      %p447 = pneg %p443
    $region251: #{tpu_custom_call.1} parent=1 // pred_check_branch
      %449 = sbr.rel (%p447) target = $region253
    $region252: #{tpu_custom_call.1} parent=1 // pred_region
      %s450 = sshll.u32 1, 1
      %s451 = ssub.s32 %s450, 1
      loop: start=0, step=1, limit=1
      $region254: #{tpu_custom_call.1} parent=252 // loop_pre_header
        _
      $region255: #{tpu_custom_call.1} parent=252 // loop_header
        %s453 = sphi 0, %s457
        %p454 = scmp.ge.s32.totalorder %s453, 1
        %s458 = sphi %s441, %s441
        %s459 = sphi [#allocation3], [#allocation3]
      $region256: #{tpu_custom_call.1} parent=252 // loop_header_branch
        %456 = sbr.rel (%p454) target = $region260
      $region257: #{tpu_custom_call.1} parent=252 // loop_body
        %v460 = vld [vmem:[%s458] sm:%s451]
        %461 = vst [vmem:[%s459] sm:%s451] %v460
      $region258: #{tpu_custom_call.1} parent=252 // loop_footer
        %s457 = sadd.s32 1, %s453
      $region259: #{tpu_custom_call.1} parent=252 // loop_footer_branch
        %452 = sbr.rel target = $region255
      $region260: #{tpu_custom_call.1} parent=252 // loop_exit
        _
    $region253: #{tpu_custom_call.1} parent=1 // pred_fallthru
      _
    // Predicated region
    $region272: #{tpu_custom_call.1} parent=1 // pred_check
      _
    $region273: #{tpu_custom_call.1} parent=1 // pred_check_branch
      %486 = sbr.rel (0) target = $region275
    $region274: #{tpu_custom_call.1} parent=1 // pred_region
      %487 = vsyncadd [#allocation5], 16
    $region275: #{tpu_custom_call.1} parent=1 // pred_fallthru
      _
    %s488 = sadd.s32 %s439, 1
    %s489 = sld [smem:[#allocation8 + %s488]]
    %s490 = scalar_lea.vmem %s3, %s489
    %s491 = scalar_lea.vmem [#allocation3], 1
    %p493 = scmp.lt.u32.totalorder 1, 8
    %p494 = pneg %p493
    // Predicated region
    $region276: #{tpu_custom_call.1} parent=1 // pred_check
      _
    $region277: #{tpu_custom_call.1} parent=1 // pred_check_branch
      %496 = sbr.rel (%p493) target = $region279
    $region278: #{tpu_custom_call.1} parent=1 // pred_region
      %s512 = sand.u32 1, 7
      %p513 = scmp.eq.s32.totalorder %s512, 0
      %p514 = pneg %p513
      // Predicated region
      $region291: #{tpu_custom_call.1} parent=278 // pred_check
        _
      $region292: #{tpu_custom_call.1} parent=278 // pred_check_branch
        %516 = sbr.rel (%p513) target = $region294
      $region293: #{tpu_custom_call.1} parent=278 // pred_region
        %s517 = sand.u32 1, 7
        %s518 = ssub.s32 1, %s517
        %s519 = scalar_lea.vmem %s490, %s518
        %s520 = ssub.s32 1, %s517
        %s521 = scalar_lea.vmem %s491, %s520 [#allocation3]
        %s522 = sshll.u32 1, %s517
        %s523 = ssub.s32 %s522, 1
        loop: start=0, step=1, limit=1
        $region295: #{tpu_custom_call.1} parent=293 // loop_pre_header
          _
        $region296: #{tpu_custom_call.1} parent=293 // loop_header
          %s525 = sphi 0, %s529
          %p526 = scmp.ge.s32.totalorder %s525, 1
          %s530 = sphi %s519, %s519
          %s531 = sphi %s521, %s521
        $region297: #{tpu_custom_call.1} parent=293 // loop_header_branch
          %528 = sbr.rel (%p526) target = $region301
        $region298: #{tpu_custom_call.1} parent=293 // loop_body
          %v532 = vld [vmem:[%s530] sm:%s523]
          %533 = vst [vmem:[%s531] sm:%s523] %v532
        $region299: #{tpu_custom_call.1} parent=293 // loop_footer
          %s529 = sadd.s32 1, %s525
        $region300: #{tpu_custom_call.1} parent=293 // loop_footer_branch
          %524 = sbr.rel target = $region296
        $region301: #{tpu_custom_call.1} parent=293 // loop_exit
          _
      $region294: #{tpu_custom_call.1} parent=278 // pred_fallthru
        _
    $region279: #{tpu_custom_call.1} parent=1 // pred_fallthru
      _
    // Predicated region
    $region280: #{tpu_custom_call.1} parent=1 // pred_check
      %p497 = pneg %p493
    $region281: #{tpu_custom_call.1} parent=1 // pred_check_branch
      %499 = sbr.rel (%p497) target = $region283
    $region282: #{tpu_custom_call.1} parent=1 // pred_region
      %s500 = sshll.u32 1, 1
      %s501 = ssub.s32 %s500, 1
      loop: start=0, step=1, limit=1
      $region284: #{tpu_custom_call.1} parent=282 // loop_pre_header
        _
      $region285: #{tpu_custom_call.1} parent=282 // loop_header
        %s503 = sphi 0, %s507
        %p504 = scmp.ge.s32.totalorder %s503, 1
        %s508 = sphi %s490, %s490
        %s509 = sphi %s491, %s491
      $region286: #{tpu_custom_call.1} parent=282 // loop_header_branch
        %506 = sbr.rel (%p504) target = $region290
      $region287: #{tpu_custom_call.1} parent=282 // loop_body
        %v510 = vld [vmem:[%s508] sm:%s501]
        %511 = vst [vmem:[%s509] sm:%s501] %v510
      $region288: #{tpu_custom_call.1} parent=282 // loop_footer
        %s507 = sadd.s32 1, %s503
      $region289: #{tpu_custom_call.1} parent=282 // loop_footer_branch
        %502 = sbr.rel target = $region285
      $region290: #{tpu_custom_call.1} parent=282 // loop_exit
        _
    $region283: #{tpu_custom_call.1} parent=1 // pred_fallthru
      _
    // Predicated region
    $region302: #{tpu_custom_call.1} parent=1 // pred_check
      _
    $region303: #{tpu_custom_call.1} parent=1 // pred_check_branch
      %536 = sbr.rel (0) target = $region305
    $region304: #{tpu_custom_call.1} parent=1 // pred_region
      %537 = vsyncadd [#allocation5], 16
    $region305: #{tpu_custom_call.1} parent=1 // pred_fallthru
      _
    %s538 = sadd.s32 %s439, 2
    %s539 = sld [smem:[#allocation8 + %s538]]
    %s540 = scalar_lea.vmem %s3, %s539
    %s541 = scalar_lea.vmem [#allocation3], 2
    %p543 = scmp.lt.u32.totalorder 1, 8
    %p544 = pneg %p543
    // Predicated region
    $region306: #{tpu_custom_call.1} parent=1 // pred_check
      _
    $region307: #{tpu_custom_call.1} parent=1 // pred_check_branch
      %546 = sbr.rel (%p543) target = $region309
    $region308: #{tpu_custom_call.1} parent=1 // pred_region
      %s562 = sand.u32 1, 7
      %p563 = scmp.eq.s32.totalorder %s562, 0
      %p564 = pneg %p563
      // Predicated region
      $region321: #{tpu_custom_call.1} parent=308 // pred_check
        _
      $region322: #{tpu_custom_call.1} parent=308 // pred_check_branch
        %566 = sbr.rel (%p563) target = $region324
      $region323: #{tpu_custom_call.1} parent=308 // pred_region
        %s567 = sand.u32 1, 7
        %s568 = ssub.s32 1, %s567
        %s569 = scalar_lea.vmem %s540, %s568
        %s570 = ssub.s32 1, %s567
        %s571 = scalar_lea.vmem %s541, %s570 [#allocation3]
        %s572 = sshll.u32 1, %s567
        %s573 = ssub.s32 %s572, 1
        loop: start=0, step=1, limit=1
        $region325: #{tpu_custom_call.1} parent=323 // loop_pre_header
          _
        $region326: #{tpu_custom_call.1} parent=323 // loop_header
          %s575 = sphi 0, %s579
          %p576 = scmp.ge.s32.totalorder %s575, 1
          %s580 = sphi %s569, %s569
          %s581 = sphi %s571, %s571
        $region327: #{tpu_custom_call.1} parent=323 // loop_header_branch
          %578 = sbr.rel (%p576) target = $region331
        $region328: #{tpu_custom_call.1} parent=323 // loop_body
          %v582 = vld [vmem:[%s580] sm:%s573]
          %583 = vst [vmem:[%s581] sm:%s573] %v582
        $region329: #{tpu_custom_call.1} parent=323 // loop_footer
          %s579 = sadd.s32 1, %s575
        $region330: #{tpu_custom_call.1} parent=323 // loop_footer_branch
          %574 = sbr.rel target = $region326
        $region331: #{tpu_custom_call.1} parent=323 // loop_exit
          _
      $region324: #{tpu_custom_call.1} parent=308 // pred_fallthru
        _
    $region309: #{tpu_custom_call.1} parent=1 // pred_fallthru
      _
    // Predicated region
    $region310: #{tpu_custom_call.1} parent=1 // pred_check
      %p547 = pneg %p543
    $region311: #{tpu_custom_call.1} parent=1 // pred_check_branch
      %549 = sbr.rel (%p547) target = $region313
    $region312: #{tpu_custom_call.1} parent=1 // pred_region
      %s550 = sshll.u32 1, 1
      %s551 = ssub.s32 %s550, 1
      loop: start=0, step=1, limit=1
      $region314: #{tpu_custom_call.1} parent=312 // loop_pre_header
        _
      $region315: #{tpu_custom_call.1} parent=312 // loop_header
        %s553 = sphi 0, %s557
        %p554 = scmp.ge.s32.totalorder %s553, 1
        %s558 = sphi %s540, %s540
        %s559 = sphi %s541, %s541
      $region316: #{tpu_custom_call.1} parent=312 // loop_header_branch
        %556 = sbr.rel (%p554) target = $region320
      $region317: #{tpu_custom_call.1} parent=312 // loop_body
        %v560 = vld [vmem:[%s558] sm:%s551]
        %561 = vst [vmem:[%s559] sm:%s551] %v560
      $region318: #{tpu_custom_call.1} parent=312 // loop_footer
        %s557 = sadd.s32 1, %s553
      $region319: #{tpu_custom_call.1} parent=312 // loop_footer_branch
        %552 = sbr.rel target = $region315
      $region320: #{tpu_custom_call.1} parent=312 // loop_exit
        _
    $region313: #{tpu_custom_call.1} parent=1 // pred_fallthru
      _
    // Predicated region
    $region332: #{tpu_custom_call.1} parent=1 // pred_check
      _
    $region333: #{tpu_custom_call.1} parent=1 // pred_check_branch
      %586 = sbr.rel (0) target = $region335
    $region334: #{tpu_custom_call.1} parent=1 // pred_region
      %587 = vsyncadd [#allocation5], 16
    $region335: #{tpu_custom_call.1} parent=1 // pred_fallthru
      _
    %s588 = sadd.s32 %s439, 3
    %s589 = sld [smem:[#allocation8 + %s588]]
    %s590 = scalar_lea.vmem %s3, %s589
    %s591 = scalar_lea.vmem [#allocation3], 3
    %p593 = scmp.lt.u32.totalorder 1, 8
    %p594 = pneg %p593
    // Predicated region
    $region336: #{tpu_custom_call.1} parent=1 // pred_check
      _
    $region337: #{tpu_custom_call.1} parent=1 // pred_check_branch
      %596 = sbr.rel (%p593) target = $region339
    $region338: #{tpu_custom_call.1} parent=1 // pred_region
      %s612 = sand.u32 1, 7
      %p613 = scmp.eq.s32.totalorder %s612, 0
      %p614 = pneg %p613
      // Predicated region
      $region351: #{tpu_custom_call.1} parent=338 // pred_check
        _
      $region352: #{tpu_custom_call.1} parent=338 // pred_check_branch
        %616 = sbr.rel (%p613) target = $region354
      $region353: #{tpu_custom_call.1} parent=338 // pred_region
        %s617 = sand.u32 1, 7
        %s618 = ssub.s32 1, %s617
        %s619 = scalar_lea.vmem %s590, %s618
        %s620 = ssub.s32 1, %s617
        %s621 = scalar_lea.vmem %s591, %s620 [#allocation3]
        %s622 = sshll.u32 1, %s617
        %s623 = ssub.s32 %s622, 1
        loop: start=0, step=1, limit=1
        $region355: #{tpu_custom_call.1} parent=353 // loop_pre_header
          _
        $region356: #{tpu_custom_call.1} parent=353 // loop_header
          %s625 = sphi 0, %s629
          %p626 = scmp.ge.s32.totalorder %s625, 1
          %s630 = sphi %s619, %s619
          %s631 = sphi %s621, %s621
        $region357: #{tpu_custom_call.1} parent=353 // loop_header_branch
          %628 = sbr.rel (%p626) target = $region361
        $region358: #{tpu_custom_call.1} parent=353 // loop_body
          %v632 = vld [vmem:[%s630] sm:%s623]
          %633 = vst [vmem:[%s631] sm:%s623] %v632
        $region359: #{tpu_custom_call.1} parent=353 // loop_footer
          %s629 = sadd.s32 1, %s625
        $region360: #{tpu_custom_call.1} parent=353 // loop_footer_branch
          %624 = sbr.rel target = $region356
        $region361: #{tpu_custom_call.1} parent=353 // loop_exit
          _
      $region354: #{tpu_custom_call.1} parent=338 // pred_fallthru
        _
    $region339: #{tpu_custom_call.1} parent=1 // pred_fallthru
      _
    // Predicated region
    $region340: #{tpu_custom_call.1} parent=1 // pred_check
      %p597 = pneg %p593
    $region341: #{tpu_custom_call.1} parent=1 // pred_check_branch
      %599 = sbr.rel (%p597) target = $region343
    $region342: #{tpu_custom_call.1} parent=1 // pred_region
      %s600 = sshll.u32 1, 1
      %s601 = ssub.s32 %s600, 1
      loop: start=0, step=1, limit=1
      $region344: #{tpu_custom_call.1} parent=342 // loop_pre_header
        _
      $region345: #{tpu_custom_call.1} parent=342 // loop_header
        %s603 = sphi 0, %s607
        %p604 = scmp.ge.s32.totalorder %s603, 1
        %s608 = sphi %s590, %s590
        %s609 = sphi %s591, %s591
      $region346: #{tpu_custom_call.1} parent=342 // loop_header_branch
        %606 = sbr.rel (%p604) target = $region350
      $region347: #{tpu_custom_call.1} parent=342 // loop_body
        %v610 = vld [vmem:[%s608] sm:%s601]
        %611 = vst [vmem:[%s609] sm:%s601] %v610
      $region348: #{tpu_custom_call.1} parent=342 // loop_footer
        %s607 = sadd.s32 1, %s603
      $region349: #{tpu_custom_call.1} parent=342 // loop_footer_branch
        %602 = sbr.rel target = $region345
      $region350: #{tpu_custom_call.1} parent=342 // loop_exit
        _
    $region343: #{tpu_custom_call.1} parent=1 // pred_fallthru
      _
    // Predicated region
    $region362: #{tpu_custom_call.1} parent=1 // pred_check
      _
    $region363: #{tpu_custom_call.1} parent=1 // pred_check_branch
      %636 = sbr.rel (0) target = $region365
    $region364: #{tpu_custom_call.1} parent=1 // pred_region
      %637 = vsyncadd [#allocation5], 16
    $region365: #{tpu_custom_call.1} parent=1 // pred_fallthru
      _
    %s638 = sadd.s32 %s439, 4
    %s639 = sld [smem:[#allocation8 + %s638]]
    %s640 = scalar_lea.vmem %s3, %s639
    %s641 = scalar_lea.vmem [#allocation3], 4
    %p643 = scmp.lt.u32.totalorder 1, 8
    %p644 = pneg %p643
    // Predicated region
    $region366: #{tpu_custom_call.1} parent=1 // pred_check
      _
    $region367: #{tpu_custom_call.1} parent=1 // pred_check_branch
      %646 = sbr.rel (%p643) target = $region369
    $region368: #{tpu_custom_call.1} parent=1 // pred_region
      %s662 = sand.u32 1, 7
      %p663 = scmp.eq.s32.totalorder %s662, 0
      %p664 = pneg %p663
      // Predicated region
      $region381: #{tpu_custom_call.1} parent=368 // pred_check
        _
      $region382: #{tpu_custom_call.1} parent=368 // pred_check_branch
        %666 = sbr.rel (%p663) target = $region384
      $region383: #{tpu_custom_call.1} parent=368 // pred_region
        %s667 = sand.u32 1, 7
        %s668 = ssub.s32 1, %s667
        %s669 = scalar_lea.vmem %s640, %s668
        %s670 = ssub.s32 1, %s667
        %s671 = scalar_lea.vmem %s641, %s670 [#allocation3]
        %s672 = sshll.u32 1, %s667
        %s673 = ssub.s32 %s672, 1
        loop: start=0, step=1, limit=1
        $region385: #{tpu_custom_call.1} parent=383 // loop_pre_header
          _
        $region386: #{tpu_custom_call.1} parent=383 // loop_header
          %s675 = sphi 0, %s679
          %p676 = scmp.ge.s32.totalorder %s675, 1
          %s680 = sphi %s669, %s669
          %s681 = sphi %s671, %s671
        $region387: #{tpu_custom_call.1} parent=383 // loop_header_branch
          %678 = sbr.rel (%p676) target = $region391
        $region388: #{tpu_custom_call.1} parent=383 // loop_body
          %v682 = vld [vmem:[%s680] sm:%s673]
          %683 = vst [vmem:[%s681] sm:%s673] %v682
        $region389: #{tpu_custom_call.1} parent=383 // loop_footer
          %s679 = sadd.s32 1, %s675
        $region390: #{tpu_custom_call.1} parent=383 // loop_footer_branch
          %674 = sbr.rel target = $region386
        $region391: #{tpu_custom_call.1} parent=383 // loop_exit
          _
      $region384: #{tpu_custom_call.1} parent=368 // pred_fallthru
        _
    $region369: #{tpu_custom_call.1} parent=1 // pred_fallthru
      _
    // Predicated region
    $region370: #{tpu_custom_call.1} parent=1 // pred_check
      %p647 = pneg %p643
    $region371: #{tpu_custom_call.1} parent=1 // pred_check_branch
      %649 = sbr.rel (%p647) target = $region373
    $region372: #{tpu_custom_call.1} parent=1 // pred_region
      %s650 = sshll.u32 1, 1
      %s651 = ssub.s32 %s650, 1
      loop: start=0, step=1, limit=1
      $region374: #{tpu_custom_call.1} parent=372 // loop_pre_header
        _
      $region375: #{tpu_custom_call.1} parent=372 // loop_header
        %s653 = sphi 0, %s657
        %p654 = scmp.ge.s32.totalorder %s653, 1
        %s658 = sphi %s640, %s640
        %s659 = sphi %s641, %s641
      $region376: #{tpu_custom_call.1} parent=372 // loop_header_branch
        %656 = sbr.rel (%p654) target = $region380
      $region377: #{tpu_custom_call.1} parent=372 // loop_body
        %v660 = vld [vmem:[%s658] sm:%s651]
        %661 = vst [vmem:[%s659] sm:%s651] %v660
      $region378: #{tpu_custom_call.1} parent=372 // loop_footer
        %s657 = sadd.s32 1, %s653
      $region379: #{tpu_custom_call.1} parent=372 // loop_footer_branch
        %652 = sbr.rel target = $region375
      $region380: #{tpu_custom_call.1} parent=372 // loop_exit
        _
    $region373: #{tpu_custom_call.1} parent=1 // pred_fallthru
      _
    // Predicated region
    $region392: #{tpu_custom_call.1} parent=1 // pred_check
      _
    $region393: #{tpu_custom_call.1} parent=1 // pred_check_branch
      %686 = sbr.rel (0) target = $region395
    $region394: #{tpu_custom_call.1} parent=1 // pred_region
      %687 = vsyncadd [#allocation5], 16
    $region395: #{tpu_custom_call.1} parent=1 // pred_fallthru
      _
    %s688 = sadd.s32 %s439, 5
    %s689 = sld [smem:[#allocation8 + %s688]]
    %s690 = scalar_lea.vmem %s3, %s689
    %s691 = scalar_lea.vmem [#allocation3], 5
    %p693 = scmp.lt.u32.totalorder 1, 8
    %p694 = pneg %p693
    // Predicated region
    $region396: #{tpu_custom_call.1} parent=1 // pred_check
      _
    $region397: #{tpu_custom_call.1} parent=1 // pred_check_branch
      %696 = sbr.rel (%p693) target = $region399
    $region398: #{tpu_custom_call.1} parent=1 // pred_region
      %s712 = sand.u32 1, 7
      %p713 = scmp.eq.s32.totalorder %s712, 0
      %p714 = pneg %p713
      // Predicated region
      $region411: #{tpu_custom_call.1} parent=398 // pred_check
        _
      $region412: #{tpu_custom_call.1} parent=398 // pred_check_branch
        %716 = sbr.rel (%p713) target = $region414
      $region413: #{tpu_custom_call.1} parent=398 // pred_region
        %s717 = sand.u32 1, 7
        %s718 = ssub.s32 1, %s717
        %s719 = scalar_lea.vmem %s690, %s718
        %s720 = ssub.s32 1, %s717
        %s721 = scalar_lea.vmem %s691, %s720 [#allocation3]
        %s722 = sshll.u32 1, %s717
        %s723 = ssub.s32 %s722, 1
        loop: start=0, step=1, limit=1
        $region415: #{tpu_custom_call.1} parent=413 // loop_pre_header
          _
        $region416: #{tpu_custom_call.1} parent=413 // loop_header
          %s725 = sphi 0, %s729
          %p726 = scmp.ge.s32.totalorder %s725, 1
          %s730 = sphi %s719, %s719
          %s731 = sphi %s721, %s721
        $region417: #{tpu_custom_call.1} parent=413 // loop_header_branch
          %728 = sbr.rel (%p726) target = $region421
        $region418: #{tpu_custom_call.1} parent=413 // loop_body
          %v732 = vld [vmem:[%s730] sm:%s723]
          %733 = vst [vmem:[%s731] sm:%s723] %v732
        $region419: #{tpu_custom_call.1} parent=413 // loop_footer
          %s729 = sadd.s32 1, %s725
        $region420: #{tpu_custom_call.1} parent=413 // loop_footer_branch
          %724 = sbr.rel target = $region416
        $region421: #{tpu_custom_call.1} parent=413 // loop_exit
          _
      $region414: #{tpu_custom_call.1} parent=398 // pred_fallthru
        _
    $region399: #{tpu_custom_call.1} parent=1 // pred_fallthru
      _
    // Predicated region
    $region400: #{tpu_custom_call.1} parent=1 // pred_check
      %p697 = pneg %p693
    $region401: #{tpu_custom_call.1} parent=1 // pred_check_branch
      %699 = sbr.rel (%p697) target = $region403
    $region402: #{tpu_custom_call.1} parent=1 // pred_region
      %s700 = sshll.u32 1, 1
      %s701 = ssub.s32 %s700, 1
      loop: start=0, step=1, limit=1
      $region404: #{tpu_custom_call.1} parent=402 // loop_pre_header
        _
      $region405: #{tpu_custom_call.1} parent=402 // loop_header
        %s703 = sphi 0, %s707
        %p704 = scmp.ge.s32.totalorder %s703, 1
        %s708 = sphi %s690, %s690
        %s709 = sphi %s691, %s691
      $region406: #{tpu_custom_call.1} parent=402 // loop_header_branch
        %706 = sbr.rel (%p704) target = $region410
      $region407: #{tpu_custom_call.1} parent=402 // loop_body
        %v710 = vld [vmem:[%s708] sm:%s701]
        %711 = vst [vmem:[%s709] sm:%s701] %v710
      $region408: #{tpu_custom_call.1} parent=402 // loop_footer
        %s707 = sadd.s32 1, %s703
      $region409: #{tpu_custom_call.1} parent=402 // loop_footer_branch
        %702 = sbr.rel target = $region405
      $region410: #{tpu_custom_call.1} parent=402 // loop_exit
        _
    $region403: #{tpu_custom_call.1} parent=1 // pred_fallthru
      _
    // Predicated region
    $region422: #{tpu_custom_call.1} parent=1 // pred_check
      _
    $region423: #{tpu_custom_call.1} parent=1 // pred_check_branch
      %736 = sbr.rel (0) target = $region425
    $region424: #{tpu_custom_call.1} parent=1 // pred_region
      %737 = vsyncadd [#allocation5], 16
    $region425: #{tpu_custom_call.1} parent=1 // pred_fallthru
      _
    %s738 = sadd.s32 %s439, 6
    %s739 = sld [smem:[#allocation8 + %s738]]
    %s740 = scalar_lea.vmem %s3, %s739
    %s741 = scalar_lea.vmem [#allocation3], 6
    %p743 = scmp.lt.u32.totalorder 1, 8
    %p744 = pneg %p743
    // Predicated region
    $region426: #{tpu_custom_call.1} parent=1 // pred_check
      _
    $region427: #{tpu_custom_call.1} parent=1 // pred_check_branch
      %746 = sbr.rel (%p743) target = $region429
    $region428: #{tpu_custom_call.1} parent=1 // pred_region
      %s762 = sand.u32 1, 7
      %p763 = scmp.eq.s32.totalorder %s762, 0
      %p764 = pneg %p763
      // Predicated region
      $region441: #{tpu_custom_call.1} parent=428 // pred_check
        _
      $region442: #{tpu_custom_call.1} parent=428 // pred_check_branch
        %766 = sbr.rel (%p763) target = $region444
      $region443: #{tpu_custom_call.1} parent=428 // pred_region
        %s767 = sand.u32 1, 7
        %s768 = ssub.s32 1, %s767
        %s769 = scalar_lea.vmem %s740, %s768
        %s770 = ssub.s32 1, %s767
        %s771 = scalar_lea.vmem %s741, %s770 [#allocation3]
        %s772 = sshll.u32 1, %s767
        %s773 = ssub.s32 %s772, 1
        loop: start=0, step=1, limit=1
        $region445: #{tpu_custom_call.1} parent=443 // loop_pre_header
          _
        $region446: #{tpu_custom_call.1} parent=443 // loop_header
          %s775 = sphi 0, %s779
          %p776 = scmp.ge.s32.totalorder %s775, 1
          %s780 = sphi %s769, %s769
          %s781 = sphi %s771, %s771
        $region447: #{tpu_custom_call.1} parent=443 // loop_header_branch
          %778 = sbr.rel (%p776) target = $region451
        $region448: #{tpu_custom_call.1} parent=443 // loop_body
          %v782 = vld [vmem:[%s780] sm:%s773]
          %783 = vst [vmem:[%s781] sm:%s773] %v782
        $region449: #{tpu_custom_call.1} parent=443 // loop_footer
          %s779 = sadd.s32 1, %s775
        $region450: #{tpu_custom_call.1} parent=443 // loop_footer_branch
          %774 = sbr.rel target = $region446
        $region451: #{tpu_custom_call.1} parent=443 // loop_exit
          _
      $region444: #{tpu_custom_call.1} parent=428 // pred_fallthru
        _
    $region429: #{tpu_custom_call.1} parent=1 // pred_fallthru
      _
    // Predicated region
    $region430: #{tpu_custom_call.1} parent=1 // pred_check
      %p747 = pneg %p743
    $region431: #{tpu_custom_call.1} parent=1 // pred_check_branch
      %749 = sbr.rel (%p747) target = $region433
    $region432: #{tpu_custom_call.1} parent=1 // pred_region
      %s750 = sshll.u32 1, 1
      %s751 = ssub.s32 %s750, 1
      loop: start=0, step=1, limit=1
      $region434: #{tpu_custom_call.1} parent=432 // loop_pre_header
        _
      $region435: #{tpu_custom_call.1} parent=432 // loop_header
        %s753 = sphi 0, %s757
        %p754 = scmp.ge.s32.totalorder %s753, 1
        %s758 = sphi %s740, %s740
        %s759 = sphi %s741, %s741
      $region436: #{tpu_custom_call.1} parent=432 // loop_header_branch
        %756 = sbr.rel (%p754) target = $region440
      $region437: #{tpu_custom_call.1} parent=432 // loop_body
        %v760 = vld [vmem:[%s758] sm:%s751]
        %761 = vst [vmem:[%s759] sm:%s751] %v760
      $region438: #{tpu_custom_call.1} parent=432 // loop_footer
        %s757 = sadd.s32 1, %s753
      $region439: #{tpu_custom_call.1} parent=432 // loop_footer_branch
        %752 = sbr.rel target = $region435
      $region440: #{tpu_custom_call.1} parent=432 // loop_exit
        _
    $region433: #{tpu_custom_call.1} parent=1 // pred_fallthru
      _
    // Predicated region
    $region452: #{tpu_custom_call.1} parent=1 // pred_check
      _
    $region453: #{tpu_custom_call.1} parent=1 // pred_check_branch
      %786 = sbr.rel (0) target = $region455
    $region454: #{tpu_custom_call.1} parent=1 // pred_region
      %787 = vsyncadd [#allocation5], 16
    $region455: #{tpu_custom_call.1} parent=1 // pred_fallthru
      _
    %s788 = sadd.s32 %s439, 7
    %s789 = sld [smem:[#allocation8 + %s788]]
    %s790 = scalar_lea.vmem %s3, %s789
    %s791 = scalar_lea.vmem [#allocation3], 7
    %p793 = scmp.lt.u32.totalorder 1, 8
    %p794 = pneg %p793
    // Predicated region
    $region456: #{tpu_custom_call.1} parent=1 // pred_check
      _
    $region457: #{tpu_custom_call.1} parent=1 // pred_check_branch
      %796 = sbr.rel (%p793) target = $region459
    $region458: #{tpu_custom_call.1} parent=1 // pred_region
      %s812 = sand.u32 1, 7
      %p813 = scmp.eq.s32.totalorder %s812, 0
      %p814 = pneg %p813
      // Predicated region
      $region471: #{tpu_custom_call.1} parent=458 // pred_check
        _
      $region472: #{tpu_custom_call.1} parent=458 // pred_check_branch
        %816 = sbr.rel (%p813) target = $region474
      $region473: #{tpu_custom_call.1} parent=458 // pred_region
        %s817 = sand.u32 1, 7
        %s818 = ssub.s32 1, %s817
        %s819 = scalar_lea.vmem %s790, %s818
        %s820 = ssub.s32 1, %s817
        %s821 = scalar_lea.vmem %s791, %s820 [#allocation3]
        %s822 = sshll.u32 1, %s817
        %s823 = ssub.s32 %s822, 1
        loop: start=0, step=1, limit=1
        $region475: #{tpu_custom_call.1} parent=473 // loop_pre_header
          _
        $region476: #{tpu_custom_call.1} parent=473 // loop_header
          %s825 = sphi 0, %s829
          %p826 = scmp.ge.s32.totalorder %s825, 1
          %s830 = sphi %s819, %s819
          %s831 = sphi %s821, %s821
        $region477: #{tpu_custom_call.1} parent=473 // loop_header_branch
          %828 = sbr.rel (%p826) target = $region481
        $region478: #{tpu_custom_call.1} parent=473 // loop_body
          %v832 = vld [vmem:[%s830] sm:%s823]
          %833 = vst [vmem:[%s831] sm:%s823] %v832
        $region479: #{tpu_custom_call.1} parent=473 // loop_footer
          %s829 = sadd.s32 1, %s825
        $region480: #{tpu_custom_call.1} parent=473 // loop_footer_branch
          %824 = sbr.rel target = $region476
        $region481: #{tpu_custom_call.1} parent=473 // loop_exit
          _
      $region474: #{tpu_custom_call.1} parent=458 // pred_fallthru
        _
    $region459: #{tpu_custom_call.1} parent=1 // pred_fallthru
      _
    // Predicated region
    $region460: #{tpu_custom_call.1} parent=1 // pred_check
      %p797 = pneg %p793
    $region461: #{tpu_custom_call.1} parent=1 // pred_check_branch
      %799 = sbr.rel (%p797) target = $region463
    $region462: #{tpu_custom_call.1} parent=1 // pred_region
      %s800 = sshll.u32 1, 1
      %s801 = ssub.s32 %s800, 1
      loop: start=0, step=1, limit=1
      $region464: #{tpu_custom_call.1} parent=462 // loop_pre_header
        _
      $region465: #{tpu_custom_call.1} parent=462 // loop_header
        %s803 = sphi 0, %s807
        %p804 = scmp.ge.s32.totalorder %s803, 1
        %s808 = sphi %s790, %s790
        %s809 = sphi %s791, %s791
      $region466: #{tpu_custom_call.1} parent=462 // loop_header_branch
        %806 = sbr.rel (%p804) target = $region470
      $region467: #{tpu_custom_call.1} parent=462 // loop_body
        %v810 = vld [vmem:[%s808] sm:%s801]
        %811 = vst [vmem:[%s809] sm:%s801] %v810
      $region468: #{tpu_custom_call.1} parent=462 // loop_footer
        %s807 = sadd.s32 1, %s803
      $region469: #{tpu_custom_call.1} parent=462 // loop_footer_branch
        %802 = sbr.rel target = $region465
      $region470: #{tpu_custom_call.1} parent=462 // loop_exit
        _
    $region463: #{tpu_custom_call.1} parent=1 // pred_fallthru
      _
    // Predicated region
    $region482: #{tpu_custom_call.1} parent=1 // pred_check
      _
    $region483: #{tpu_custom_call.1} parent=1 // pred_check_branch
      %836 = sbr.rel (0) target = $region485
    $region484: #{tpu_custom_call.1} parent=1 // pred_region
      %837 = vsyncadd [#allocation5], 16
    $region485: #{tpu_custom_call.1} parent=1 // pred_fallthru
      _
    %839 = dma.done [#allocation5], 16
    %841 = dma.done [#allocation5], 16
    %843 = dma.done [#allocation5], 16
    %845 = dma.done [#allocation5], 16
    %847 = dma.done [#allocation5], 16
    %849 = dma.done [#allocation5], 16
    %851 = dma.done [#allocation5], 16
    %853 = dma.done [#allocation5], 16
    %v854 = vld [vmem:[#allocation2] sm:$0xff]
    %v855 = vld [vmem:[#allocation3] sm:$0xff]
    %vm856 = vcmask 261120
    %v858 = vsel %vm856, %v854, 0
    %v861 = vsel %vm856, %v855, 0
    %863 = vmatprep.subr.mxu0 0.0
    %864 = vmatpush1.xpose.msra.mxu0 0.0
    %865 = vmatprep.subr.mxu0 0.0
    %866 = vmatpush1.xpose.msra.mxu0 0.0
    %867 = vmatprep.subr.mxu0 0.0
    %868 = vmatpush1.xpose.msra.mxu0 0.0
    %869 = vmatprep.subr.mxu0 0.0
    %870 = vmatpush1.xpose.msra.mxu0 0.0
    %871 = vmatprep.subr.mxu0 0.0
    %872 = vmatpush1.xpose.msra.mxu0 0.0
    %873 = vmatprep.subr.mxu0 0.0
    %874 = vmatpush1.xpose.msra.mxu0 0.0
    %875 = vmatprep.subr.mxu0 0.0
    %876 = vmatpush1.xpose.msra.mxu0 0.0
    %877 = vmatprep.subr.mxu0 0.0
    %878 = vmatpush1.xpose.msra.mxu0 0.0
    %879 = vmatprep.subr.mxu0 0.0
    %880 = vmatpush1.xpose.msra.mxu0 0.0
    %881 = vmatprep.subr.mxu0 0.0
    %882 = vmatpush1.xpose.msra.mxu0 0.0
    %883 = vmatprep.subr.mxu0 0.0
    %884 = vmatpush1.xpose.msra.mxu0 0.0
    %885 = vmatprep.subr.mxu0 0.0
    %886 = vmatpush1.xpose.msra.mxu0 0.0
    %887 = vmatprep.subr.mxu0 0.0
    %888 = vmatpush1.xpose.msra.mxu0 0.0
    %889 = vmatprep.subr.mxu0 0.0
    %890 = vmatpush1.xpose.msra.mxu0 0.0
    %891 = vmatprep.subr.mxu0 0.0
    %892 = vmatpush1.xpose.msra.mxu0 0.0
    %893 = vmatprep.subr.mxu0 0.0
    %894 = vmatpush1.xpose.msra.mxu0 %v861
    %895 = vmatprep.subr.mxu0 0.0
    %896 = vmatpush2.xpose.msra.mxu0 0.0
    %897 = vmatprep.subr.mxu0 0.0
    %898 = vmatpush2.xpose.msra.mxu0 0.0
    %899 = vmatprep.subr.mxu0 0.0
    %900 = vmatpush2.xpose.msra.mxu0 0.0
    %901 = vmatprep.subr.mxu0 0.0
    %902 = vmatpush2.xpose.msra.mxu0 0.0
    %903 = vmatprep.subr.mxu0 0.0
    %904 = vmatpush2.xpose.msra.mxu0 0.0
    %905 = vmatprep.subr.mxu0 0.0
    %906 = vmatpush2.xpose.msra.mxu0 0.0
    %907 = vmatprep.subr.mxu0 0.0
    %908 = vmatpush2.xpose.msra.mxu0 0.0
    %909 = vmatprep.subr.mxu0 0.0
    %910 = vmatpush2.xpose.msra.mxu0 0.0
    %911 = vmatprep.subr.mxu0 0.0
    %912 = vmatpush2.xpose.msra.mxu0 0.0
    %913 = vmatprep.subr.mxu0 0.0
    %914 = vmatpush2.xpose.msra.mxu0 0.0
    %915 = vmatprep.subr.mxu0 0.0
    %916 = vmatpush2.xpose.msra.mxu0 0.0
    %917 = vmatprep.subr.mxu0 0.0
    %918 = vmatpush2.xpose.msra.mxu0 0.0
    %919 = vmatprep.subr.mxu0 0.0
    %920 = vmatpush2.xpose.msra.mxu0 0.0
    %921 = vmatprep.subr.mxu0 0.0
    %922 = vmatpush2.xpose.msra.mxu0 0.0
    %923 = vmatprep.subr.mxu0 0.0
    %924 = vmatpush2.xpose.msra.mxu0 0.0
    %925 = vmatprep.subr.mxu0 0.0
    %926 = vmatpush2.xpose.msra.mxu0 0.0
    %927 = vmatprep.mubr.f32.mxu0 0.0
    %928 = vmatmul.mubr.f32.gmra.mxu0 %v858
    %v929 = vpop.f32.mrf.mxu0
    %v930 = vadd.f32 0.0, %v929
    %v931 = vpop.f32.mrf.mxu0
    %932 = vdwg.mxu0
    %vm933 = vcmask 64512
    %934 = vst.msk [vmem:[#allocation9] sm:$0xff] %vm933, %v930
    // Predicated region
    $region486: #{tpu_custom_call.1} parent=1 // pred_check
      _
    $region487: #{tpu_custom_call.1} parent=1 // pred_check_branch
      %936 = sbr.rel (0) target = $region489
    $region488: #{tpu_custom_call.1} parent=1 // pred_region
      %s938 = ssub.s32 128, 128
      %939 = vsyncadd [#allocation10], %s938
      %s941 = sshll.u32 [#allocation9], 4
      %s942 = int_to_ptr.vmem [resolvable:$true] %s941
      %944 = dma.vmem_to_hbm [thread:$0]  %s942, 128, %s4, [#allocation10]
    $region489: #{tpu_custom_call.1} parent=1 // pred_fallthru
      _
    // Predicated region
    $region490: #{tpu_custom_call.1} parent=1 // pred_check
      _
    $region491: #{tpu_custom_call.1} parent=1 // pred_check_branch
      %946 = sbr.rel (0) target = $region493
    $region492: #{tpu_custom_call.1} parent=1 // pred_region
      %947 = dma.done [#allocation10], 128
    $region493: #{tpu_custom_call.1} parent=1 // pred_fallthru
      _
    %948 = vsyncpa [#allocation10], 1
  %949 = vsyncmov [#allocation4]
  %s950 = vpop.sfrf %949
  %p951 = scmp.eq.s32.totalorder %s950, 0
  %p952 = pneg %p951
  %954 = shalt.err (%p952)
  %955 = vsyncmov [#allocation5]
  %s956 = vpop.sfrf %955
  %p957 = scmp.eq.s32.totalorder %s956, 0
  %p958 = pneg %p957
  %960 = shalt.err (%p958)

</llo_original>
